<compile_context>
chip_gen: v6e
topology: v6e:2x2x1
jax: 0.10.0
libtpu: 0.0.40
codegen_flags: <defaults>
</compile_context>

<pallas_src>
import math
import jax
import jax.numpy as jnp
from jax import lax
from jax.experimental import pallas as pl
from jax.experimental.pallas import tpu as pltpu


# ---------------------------------------------------------------------------
# Hardware-derived VMEM limit (v7x: 64 MiB physical, v5e/v6e: 128 MiB)
# ---------------------------------------------------------------------------
def _vmem_limit_bytes():
    cap = 64 * 1024 * 1024
    try:
        info = pltpu.get_tpu_info()
        cap = int(getattr(info, "vmem_capacity_bytes", cap) or cap)
    except Exception:
        pass
    # ~80% of physical, capped at 100 MiB, never below 32 MiB.
    return max(32 * 1024 * 1024, min(int(cap * 0.8), 100 * 1024 * 1024))


# ---------------------------------------------------------------------------
# Fused kernel: projections + per-head attention + fused fc + residual + LN
# ---------------------------------------------------------------------------
def _make_mha_kernel(n_head, d_k, d_v, eps, with_bias, with_attn, matmul_dtype):
    def kernel(*refs):
        it = iter(refs)
        q_ref = next(it)                 # (1, block_q, d_model) f32 -- also residual
        k_ref = next(it)                 # (1, len_k, d_model)
        v_ref = next(it)                 # (1, len_k, d_model)
        bias_ref = next(it) if with_bias else None
        wqt_ref = next(it)               # (d_model, n_head*d_k)  matmul_dtype, *1/temp
        wkt_ref = next(it)               # (d_model, n_head*d_k)  matmul_dtype
        wvt_ref = next(it)               # (d_model, n_head*d_v)  matmul_dtype
        fcwt_ref = next(it)              # (n_head*d_v, d_model)  matmul_dtype
        fcb_ref = next(it)               # (1, d_model) f32
        gamma_ref = next(it)             # (1, d_model) f32
        beta_ref = next(it)              # (1, d_model) f32
        out_ref = next(it)               # (1, block_q, d_model) f32
        attn_ref = next(it) if with_attn else None  # (n_head, 1, block_q, len_k)

        q = q_ref[0]                     # (block_q, d_model) f32 residual
        k = k_ref[0]
        v = v_ref[0]

        # Fused-head projections: one wide matmul each; weights already
        # pre-transposed, pre-scaled (1/temperature in Wq) and in matmul_dtype.
        Q = jnp.dot(q.astype(matmul_dtype), wqt_ref[...],
                    preferred_element_type=jnp.float32)
        K = jnp.dot(k.astype(matmul_dtype), wkt_ref[...],
                    preferred_element_type=jnp.float32)
        V = jnp.dot(v.astype(matmul_dtype), wvt_ref[...],
                    preferred_element_type=jnp.float32)
        # One cast for the per-head MXU operands (not per head slice).
        Qm = Q.astype(matmul_dtype)
        Km = K.astype(matmul_dtype)
        Vm = V.astype(matmul_dtype)

        bias = bias_ref[0] if with_bias else None    # (block_q, len_k) additive

        head_outs = []
        for h in range(n_head):          # static unroll over heads
            qh = Qm[:, h * d_k:(h + 1) * d_k]        # (block_q, d_k)
            kh = Km[:, h * d_k:(h + 1) * d_k]        # (len_k, d_k)
            vh = Vm[:, h * d_v:(h + 1) * d_v]        # (len_k, d_v)

            # scores = qh @ kh^T, contracting last dims (no explicit transpose)
            s = lax.dot_general(qh, kh, (((1,), (1,)), ((), ())),
                                preferred_element_type=jnp.float32)
            if with_bias:
                s = s + bias

            m = jnp.max(s, axis=-1, keepdims=True)
            e = jnp.exp(s - m)
            l = jnp.sum(e, axis=-1, keepdims=True)
            p = e / l                                 # exact softmax (PyTorch parity)
            if with_attn:
                attn_ref[h, 0] = p.astype(attn_ref.dtype)

            head_outs.append(jnp.dot(p.astype(matmul_dtype), vh,
                                     preferred_element_type=jnp.float32))

        # ONE deep-contraction output projection: (block_q, n_head*d_v) x
        # (n_head*d_v, d_model) instead of n_head shallow matmuls + f32 adds.
        o_cat = jnp.concatenate(head_outs, axis=-1)   # (block_q, n_head*d_v)
        y = q + fcb_ref[...] + jnp.dot(o_cat.astype(matmul_dtype), fcwt_ref[...],
                                       preferred_element_type=jnp.float32)

        # LayerNorm(fc(concat) + residual); dropout is identity in eval mode.
        mean = jnp.mean(y, axis=-1, keepdims=True)
        var = jnp.mean((y - mean) * (y - mean), axis=-1, keepdims=True)
        y_norm = (y - mean) * lax.rsqrt(var + eps)
        out_ref[0] = (y_norm * gamma_ref[...] + beta_ref[...]).astype(out_ref.dtype)

    return kernel


# ---------------------------------------------------------------------------
# Wrapper
# ---------------------------------------------------------------------------
def multi_head_attention(params, q, k, v, mask=None, *, n_head, d_k, d_v,
                         return_attn=True, matmul_dtype=jnp.bfloat16,
                         attn_dtype=jnp.float32, block_q=None, eps=1e-5):
    """mask: bool (len_q, len_k) batch-shared or (sz_b, len_q, len_k);
    True means 'masked out' (PyTorch masked_fill semantics, additive -1e10)."""
    sz_b, len_q, d_model = q.shape
    len_k = k.shape[1]
    inv_temperature = 1.0 / float(math.sqrt(d_k))

    # Query tiling (multiple of 8); fall back to whole len_q if it doesn't divide.
    if block_q is None:
        block_q = min(256, len_q)
    if len_q % block_q != 0 or block_q % 8 not in (0, block_q % len_q):
        block_q = len_q
    if len_q % block_q != 0:
        block_q = len_q
    num_q = len_q // block_q

    with_bias = mask is not None

    inputs = [q, k, v]
    in_specs = [
        pl.BlockSpec((1, block_q, d_model), lambda b, qi: (b, qi, 0)),   # q (+residual)
        pl.BlockSpec((1, len_k, d_model), lambda b, qi: (b, 0, 0)),      # k (whole, per batch)
        pl.BlockSpec((1, len_k, d_model), lambda b, qi: (b, 0, 0)),      # v
    ]

    if with_bias:
        mask = jnp.asarray(mask)
        bias = jnp.where(mask, jnp.float32(-10000000000.0),
                         jnp.float32(0.0)).astype(jnp.float32)
        if bias.ndim == 2:
            # Batch-shared mask: ship once, resident (constant batch index).
            bias = bias.reshape(1, len_q, len_k)
            bias_map = lambda b, qi: (0, qi, 0)
        else:
            bias_map = lambda b, qi: (b, qi, 0)
        inputs.append(bias)
        in_specs.append(pl.BlockSpec((1, block_q, len_k), bias_map))

    # Pre-transpose + pre-scale + pre-cast weights once in the wrapper.
    wqt = (params["w_qs"].T * inv_temperature).astype(matmul_dtype)   # (d_model, n_head*d_k)
    wkt = params["w_ks"].T.astype(matmul_dtype)                       # (d_model, n_head*d_k)
    wvt = params["w_vs"].T.astype(matmul_dtype)                       # (d_model, n_head*d_v)
    fcwt = params["fc_w"].T.astype(matmul_dtype)                      # (n_head*d_v, d_model)
    fcb2 = params["fc_b"].reshape(1, d_model).astype(jnp.float32)
    gamma2 = params["ln_gamma"].reshape(1, d_model).astype(jnp.float32)
    beta2 = params["ln_beta"].reshape(1, d_model).astype(jnp.float32)

    inputs += [wqt, wkt, wvt, fcwt, fcb2, gamma2, beta2]
    in_specs += [
        pl.BlockSpec((d_model, n_head * d_k), lambda b, qi: (0, 0)),  # Wq^T (resident)
        pl.BlockSpec((d_model, n_head * d_k), lambda b, qi: (0, 0)),  # Wk^T
        pl.BlockSpec((d_model, n_head * d_v), lambda b, qi: (0, 0)),  # Wv^T
        pl.BlockSpec((n_head * d_v, d_model), lambda b, qi: (0, 0)),  # fc W^T
        pl.BlockSpec((1, d_model), lambda b, qi: (0, 0)),             # fc bias
        pl.BlockSpec((1, d_model), lambda b, qi: (0, 0)),             # LN gamma
        pl.BlockSpec((1, d_model), lambda b, qi: (0, 0)),             # LN beta
    ]

    out_shapes = [jax.ShapeDtypeStruct((sz_b, len_q, d_model), jnp.float32)]
    out_specs = [pl.BlockSpec((1, block_q, d_model), lambda b, qi: (b, qi, 0))]
    if return_attn:
        out_shapes.append(
            jax.ShapeDtypeStruct((n_head, sz_b, len_q, len_k), attn_dtype))
        out_specs.append(
            pl.BlockSpec((n_head, 1, block_q, len_k), lambda b, qi: (0, b, qi, 0)))

    kernel = _make_mha_kernel(n_head, d_k, d_v, eps, with_bias, return_attn,
                              matmul_dtype)

    results = pl.pallas_call(
        kernel,
        out_shape=tuple(out_shapes) if return_attn else out_shapes[0],
        grid_spec=pltpu.PrefetchScalarGridSpec(
            num_scalar_prefetch=0,
            grid=(sz_b, num_q),
            in_specs=in_specs,
            out_specs=tuple(out_specs) if return_attn else out_specs[0],
        ),
        compiler_params=pltpu.CompilerParams(
            dimension_semantics=("parallel", "parallel"),
            vmem_limit_bytes=_vmem_limit_bytes()),
    )(*inputs)

    if return_attn:
        output, attn_h = results
        # (n_head, sz_b, len_q, len_k) -> (n_head*sz_b, len_q, len_k), head-major,
        # exactly like PyTorch's view(-1, len_q, len_k); contiguous, so free.
        attn = attn_h.reshape(n_head * sz_b, len_q, len_k)
        return output, attn
    return results, None


# ---------------------------------------------------------------------------
# Parameter init matching the PyTorch module
# ---------------------------------------------------------------------------
def init_params(key, n_head, d_model, d_k, d_v):
    k1, k2, k3, k4, k5 = jax.random.split(key, 5)
    std_qk = math.sqrt(2.0 / (d_model + d_k))
    std_v = math.sqrt(2.0 / (d_model + d_v))
    # PyTorch Linear weight layout: (out_features, in_features)
    w_qs = std_qk * jax.random.normal(k1, (n_head * d_k, d_model), jnp.float32)
    w_ks = std_qk * jax.random.normal(k2, (n_head * d_k, d_model), jnp.float32)
    w_vs = std_v * jax.random.normal(k3, (n_head * d_v, d_model), jnp.float32)
    std_fc = math.sqrt(2.0 / (n_head * d_v + d_model))       # xavier_normal
    fc_w = std_fc * jax.random.normal(k4, (d_model, n_head * d_v), jnp.float32)
    bound = 1.0 / math.sqrt(n_head * d_v)
    fc_b = jax.random.uniform(k5, (d_model,), jnp.float32, -bound, bound)
    return {
        "w_qs": w_qs, "w_ks": w_ks, "w_vs": w_vs,
        "fc_w": fc_w, "fc_b": fc_b,
        "ln_gamma": jnp.ones((d_model,), jnp.float32),
        "ln_beta": jnp.zeros((d_model,), jnp.float32),
    }


# ---------------------------------------------------------------------------
# Pure-JAX reference (mirrors the PyTorch forward, eval mode)
# ---------------------------------------------------------------------------
def _reference(params, q, k, v, mask, n_head, d_k, d_v, eps=1e-5):
    sz_b, len_q, d_model = q.shape
    len_k = k.shape[1]
    temperature = math.sqrt(d_k)
    Q = (q @ params["w_qs"].T).reshape(sz_b, len_q, n_head, d_k)
    K = (k @ params["w_ks"].T).reshape(sz_b, len_k, n_head, d_k)
    V = (v @ params["w_vs"].T).reshape(sz_b, len_k, n_head, d_v)
    Q = jnp.transpose(Q, (2, 0, 1, 3)).reshape(-1, len_q, d_k)
    K = jnp.transpose(K, (2, 0, 1, 3)).reshape(-1, len_k, d_k)
    V = jnp.transpose(V, (2, 0, 1, 3)).reshape(-1, len_k, d_v)
    s = jnp.einsum("bqd,bkd->bqk", Q, K) / temperature
    if mask is not None:
        m = jnp.broadcast_to(mask, (sz_b, len_q, len_k))
        m = jnp.tile(m, (n_head, 1, 1))
        s = jnp.where(m, jnp.float32(-10000000000.0), s)
    attn = jax.nn.softmax(s, axis=-1)
    out = jnp.einsum("bqk,bkd->bqd", attn, V)
    out = out.reshape(n_head, sz_b, len_q, d_v)
    out = jnp.transpose(out, (1, 2, 0, 3)).reshape(sz_b, len_q, n_head * d_v)
    out = out @ params["fc_w"].T + params["fc_b"] + q
    mean = out.mean(-1, keepdims=True)
    var = ((out - mean) ** 2).mean(-1, keepdims=True)
    out = (out - mean) / jnp.sqrt(var + eps) * params["ln_gamma"] + params["ln_beta"]
    return out, attn


if __name__ == "__main__":
    n_head, d_model, d_k, d_v = 4, 32, 8, 8
    sz_b, seq = 2, 8

    key = jax.random.PRNGKey(0)
    kp, kq, kk, kv = jax.random.split(key, 4)

    params = init_params(kp, n_head, d_model, d_k, d_v)
    q = jax.random.normal(kq, (sz_b, seq, d_model), jnp.float32)
    k = jax.random.normal(kk, (sz_b, seq, d_model), jnp.float32)
    v = jax.random.normal(kv, (sz_b, seq, d_model), jnp.float32)
    # Boolean causal mask, True = masked position; batch-shared 2-D form so the
    # wrapper ships one resident (len_q, len_k) bias instead of a broadcast copy.
    causal = jnp.triu(jnp.ones((seq, seq), jnp.bool_), k=1)

    output, attn = multi_head_attention(
        params, q, k, v, causal, n_head=n_head, d_k=d_k, d_v=d_v,
        return_attn=True, matmul_dtype=jnp.bfloat16, attn_dtype=jnp.float32)
    jax.block_until_ready((output, attn))

    assert output.shape == (sz_b, seq, d_model)
    assert attn.shape == (n_head * sz_b, seq, seq)
    assert bool(jnp.all(jnp.isfinite(output))) and bool(jnp.all(jnp.isfinite(attn)))

    out_ref, attn_ref = _reference(params, q, k, v, causal, n_head, d_k, d_v)
    assert bool(jnp.allclose(attn, attn_ref, atol=5e-2, rtol=5e-2)), "attn mismatch"
    assert bool(jnp.allclose(output, out_ref, atol=6e-2, rtol=6e-2)), "output mismatch"

    print("KERNEL_OK")
</pallas_src>

<mosaic_0001>
module attributes {stable_mosaic.version = 11 : i64} {
  func.func @kernel(%arg0: i32, %arg1: i32, %arg2: memref<1x8x32xf32, #tpu.memory_space<vmem>>, %arg3: memref<1x8x32xf32, #tpu.memory_space<vmem>>, %arg4: memref<1x8x32xf32, #tpu.memory_space<vmem>>, %arg5: memref<1x8x8xf32, #tpu.memory_space<vmem>>, %arg6: memref<32x32xbf16, #tpu.memory_space<vmem>>, %arg7: memref<32x32xbf16, #tpu.memory_space<vmem>>, %arg8: memref<32x32xbf16, #tpu.memory_space<vmem>>, %arg9: memref<32x32xbf16, #tpu.memory_space<vmem>>, %arg10: memref<1x32xf32, #tpu.memory_space<vmem>>, %arg11: memref<1x32xf32, #tpu.memory_space<vmem>>, %arg12: memref<1x32xf32, #tpu.memory_space<vmem>>, %arg13: memref<1x8x32xf32, #tpu.memory_space<vmem>>, %arg14: memref<4x1x8x8xf32, #tpu.memory_space<vmem>>) attributes {dimension_semantics = [#tpu.dimension_semantics<parallel>, #tpu.dimension_semantics<parallel>], iteration_bounds = array<i64: 2, 1>, scalar_prefetch = 0 : i64, scratch_operands = 0 : i64, tpu.core_type = #tpu.core_type<tc>, window_params = [{transform_indices = @transform_0, window_bounds = array<i64: 1, 8, 32>}, {transform_indices = @transform_1, window_bounds = array<i64: 1, 8, 32>}, {transform_indices = @transform_2, window_bounds = array<i64: 1, 8, 32>}, {transform_indices = @transform_3, window_bounds = array<i64: 1, 8, 8>}, {pipeline_mode = #tpu.pipeline_mode<synchronous>, transform_indices = @transform_4, window_bounds = array<i64: 32, 32>}, {pipeline_mode = #tpu.pipeline_mode<synchronous>, transform_indices = @transform_5, window_bounds = array<i64: 32, 32>}, {pipeline_mode = #tpu.pipeline_mode<synchronous>, transform_indices = @transform_6, window_bounds = array<i64: 32, 32>}, {pipeline_mode = #tpu.pipeline_mode<synchronous>, transform_indices = @transform_7, window_bounds = array<i64: 32, 32>}, {pipeline_mode = #tpu.pipeline_mode<synchronous>, transform_indices = @transform_8, window_bounds = array<i64: 1, 32>}, {pipeline_mode = #tpu.pipeline_mode<synchronous>, transform_indices = @transform_9, window_bounds = array<i64: 1, 32>}, {pipeline_mode = #tpu.pipeline_mode<synchronous>, transform_indices = @transform_10, window_bounds = array<i64: 1, 32>}, {transform_indices = @transform_11, window_bounds = array<i64: 1, 8, 32>}, {transform_indices = @transform_12, window_bounds = array<i64: 4, 1, 8, 8>}]} {
    %c0 = arith.constant 0 : index
    %c0_0 = arith.constant 0 : index
    %c0_1 = arith.constant 0 : index
    %0 = vector.load %arg2[%c0, %c0_0, %c0_1] : memref<1x8x32xf32, #tpu.memory_space<vmem>>, vector<1x8x32xf32>
    %1 = vector.shape_cast %0 : vector<1x8x32xf32> to vector<8x32xf32>
    %c0_2 = arith.constant 0 : index
    %c0_3 = arith.constant 0 : index
    %c0_4 = arith.constant 0 : index
    %2 = vector.load %arg3[%c0_2, %c0_3, %c0_4] : memref<1x8x32xf32, #tpu.memory_space<vmem>>, vector<1x8x32xf32>
    %3 = vector.shape_cast %2 : vector<1x8x32xf32> to vector<8x32xf32>
    %c0_5 = arith.constant 0 : index
    %c0_6 = arith.constant 0 : index
    %c0_7 = arith.constant 0 : index
    %4 = vector.load %arg4[%c0_5, %c0_6, %c0_7] : memref<1x8x32xf32, #tpu.memory_space<vmem>>, vector<1x8x32xf32>
    %5 = vector.shape_cast %4 : vector<1x8x32xf32> to vector<8x32xf32>
    %6 = arith.truncf %1 : vector<8x32xf32> to vector<8x32xbf16>
    %c0_8 = arith.constant 0 : index
    %c0_9 = arith.constant 0 : index
    %7 = vector.load %arg6[%c0_8, %c0_9] : memref<32x32xbf16, #tpu.memory_space<vmem>>, vector<32x32xbf16>
    %cst = arith.constant dense<0.000000e+00> : vector<8x32xf32>
    %8 = tpu.matmul %6, %7, %cst {dimension_numbers = #tpu.dot_dimension_numbers<[1], [0], [0], [1], [0, 0, 1, 1], [], []>} : vector<8x32xbf16>, vector<32x32xbf16>, vector<8x32xf32> -> vector<8x32xf32>
    %9 = arith.truncf %3 : vector<8x32xf32> to vector<8x32xbf16>
    %c0_10 = arith.constant 0 : index
    %c0_11 = arith.constant 0 : index
    %10 = vector.load %arg7[%c0_10, %c0_11] : memref<32x32xbf16, #tpu.memory_space<vmem>>, vector<32x32xbf16>
    %cst_12 = arith.constant dense<0.000000e+00> : vector<8x32xf32>
    %11 = tpu.matmul %9, %10, %cst_12 {dimension_numbers = #tpu.dot_dimension_numbers<[1], [0], [0], [1], [0, 0, 1, 1], [], []>} : vector<8x32xbf16>, vector<32x32xbf16>, vector<8x32xf32> -> vector<8x32xf32>
    %12 = arith.truncf %5 : vector<8x32xf32> to vector<8x32xbf16>
    %c0_13 = arith.constant 0 : index
    %c0_14 = arith.constant 0 : index
    %13 = vector.load %arg8[%c0_13, %c0_14] : memref<32x32xbf16, #tpu.memory_space<vmem>>, vector<32x32xbf16>
    %cst_15 = arith.constant dense<0.000000e+00> : vector<8x32xf32>
    %14 = tpu.matmul %12, %13, %cst_15 {dimension_numbers = #tpu.dot_dimension_numbers<[1], [0], [0], [1], [0, 0, 1, 1], [], []>} : vector<8x32xbf16>, vector<32x32xbf16>, vector<8x32xf32> -> vector<8x32xf32>
    %15 = arith.truncf %8 : vector<8x32xf32> to vector<8x32xbf16>
    %16 = arith.truncf %11 : vector<8x32xf32> to vector<8x32xbf16>
    %17 = arith.truncf %14 : vector<8x32xf32> to vector<8x32xbf16>
    %c0_16 = arith.constant 0 : index
    %c0_17 = arith.constant 0 : index
    %c0_18 = arith.constant 0 : index
    %18 = vector.load %arg5[%c0_16, %c0_17, %c0_18] : memref<1x8x8xf32, #tpu.memory_space<vmem>>, vector<1x8x8xf32>
    %19 = vector.shape_cast %18 : vector<1x8x8xf32> to vector<8x8xf32>
    %20 = vector.extract_strided_slice %15 {offsets = [0, 0], sizes = [8, 8], strides = [1, 1]} : vector<8x32xbf16> to vector<8x8xbf16>
    %21 = vector.extract_strided_slice %16 {offsets = [0, 0], sizes = [8, 8], strides = [1, 1]} : vector<8x32xbf16> to vector<8x8xbf16>
    %22 = vector.extract_strided_slice %17 {offsets = [0, 0], sizes = [8, 8], strides = [1, 1]} : vector<8x32xbf16> to vector<8x8xbf16>
    %cst_19 = arith.constant dense<0.000000e+00> : vector<8x8xf32>
    %23 = tpu.matmul %20, %21, %cst_19 {dimension_numbers = #tpu.dot_dimension_numbers<[1], [1], [0], [0], [0, 0, 1, 0], [], []>} : vector<8x8xbf16>, vector<8x8xbf16>, vector<8x8xf32> -> vector<8x8xf32>
    %24 = arith.addf %23, %19 : vector<8x8xf32>
    %cst_20 = arith.constant dense<0xFF800000> : vector<8xf32>
    %25 = vector.multi_reduction <maximumf>, %24, %cst_20 [1] : vector<8x8xf32> to vector<8xf32>
    %26 = vector.shape_cast %25 : vector<8xf32> to vector<8x1xf32>
    %27 = vector.broadcast %26 : vector<8x1xf32> to vector<8x8xf32>
    %28 = arith.subf %24, %27 : vector<8x8xf32>
    %29 = math.exp %28 : vector<8x8xf32>
    %cst_21 = arith.constant dense<0.000000e+00> : vector<8xf32>
    %30 = vector.multi_reduction <add>, %29, %cst_21 [1] : vector<8x8xf32> to vector<8xf32>
    %31 = vector.shape_cast %30 : vector<8xf32> to vector<8x1xf32>
    %32 = vector.broadcast %31 : vector<8x1xf32> to vector<8x8xf32>
    %33 = arith.divf %29, %32 : vector<8x8xf32>
    %c0_22 = arith.constant 0 : index
    %c0_23 = arith.constant 0 : index
    %c0_24 = arith.constant 0 : index
    %c0_25 = arith.constant 0 : index
    %34 = vector.load %arg14[%c0_22, %c0_23, %c0_24, %c0_25] : memref<4x1x8x8xf32, #tpu.memory_space<vmem>>, vector<1x1x8x8xf32>
    %35 = vector.shape_cast %34 : vector<1x1x8x8xf32> to vector<8x8xf32>
    %36 = vector.shape_cast %33 : vector<8x8xf32> to vector<1x1x8x8xf32>
    tpu.vector_store %arg14[%c0_22, %c0_23, %c0_24, %c0_25], %36 {strides = array<i32>} : memref<4x1x8x8xf32, #tpu.memory_space<vmem>>, vector<1x1x8x8xf32>,
    %37 = arith.truncf %33 : vector<8x8xf32> to vector<8x8xbf16>
    %cst_26 = arith.constant dense<0.000000e+00> : vector<8x8xf32>
    %38 = tpu.matmul %37, %22, %cst_26 {dimension_numbers = #tpu.dot_dimension_numbers<[1], [0], [0], [1], [0, 0, 1, 1], [], []>} : vector<8x8xbf16>, vector<8x8xbf16>, vector<8x8xf32> -> vector<8x8xf32>
    %39 = vector.extract_strided_slice %15 {offsets = [0, 8], sizes = [8, 8], strides = [1, 1]} : vector<8x32xbf16> to vector<8x8xbf16>
    %40 = vector.extract_strided_slice %16 {offsets = [0, 8], sizes = [8, 8], strides = [1, 1]} : vector<8x32xbf16> to vector<8x8xbf16>
    %41 = vector.extract_strided_slice %17 {offsets = [0, 8], sizes = [8, 8], strides = [1, 1]} : vector<8x32xbf16> to vector<8x8xbf16>
    %cst_27 = arith.constant dense<0.000000e+00> : vector<8x8xf32>
    %42 = tpu.matmul %39, %40, %cst_27 {dimension_numbers = #tpu.dot_dimension_numbers<[1], [1], [0], [0], [0, 0, 1, 0], [], []>} : vector<8x8xbf16>, vector<8x8xbf16>, vector<8x8xf32> -> vector<8x8xf32>
    %43 = arith.addf %42, %19 : vector<8x8xf32>
    %cst_28 = arith.constant dense<0xFF800000> : vector<8xf32>
    %44 = vector.multi_reduction <maximumf>, %43, %cst_28 [1] : vector<8x8xf32> to vector<8xf32>
    %45 = vector.shape_cast %44 : vector<8xf32> to vector<8x1xf32>
    %46 = vector.broadcast %45 : vector<8x1xf32> to vector<8x8xf32>
    %47 = arith.subf %43, %46 : vector<8x8xf32>
    %48 = math.exp %47 : vector<8x8xf32>
    %cst_29 = arith.constant dense<0.000000e+00> : vector<8xf32>
    %49 = vector.multi_reduction <add>, %48, %cst_29 [1] : vector<8x8xf32> to vector<8xf32>
    %50 = vector.shape_cast %49 : vector<8xf32> to vector<8x1xf32>
    %51 = vector.broadcast %50 : vector<8x1xf32> to vector<8x8xf32>
    %52 = arith.divf %48, %51 : vector<8x8xf32>
    %c1 = arith.constant 1 : index
    %c0_30 = arith.constant 0 : index
    %c0_31 = arith.constant 0 : index
    %c0_32 = arith.constant 0 : index
    %53 = vector.load %arg14[%c1, %c0_30, %c0_31, %c0_32] : memref<4x1x8x8xf32, #tpu.memory_space<vmem>>, vector<1x1x8x8xf32>
    %54 = vector.shape_cast %53 : vector<1x1x8x8xf32> to vector<8x8xf32>
    %55 = vector.shape_cast %52 : vector<8x8xf32> to vector<1x1x8x8xf32>
    tpu.vector_store %arg14[%c1, %c0_30, %c0_31, %c0_32], %55 {strides = array<i32>} : memref<4x1x8x8xf32, #tpu.memory_space<vmem>>, vector<1x1x8x8xf32>,
    %56 = arith.truncf %52 : vector<8x8xf32> to vector<8x8xbf16>
    %cst_33 = arith.constant dense<0.000000e+00> : vector<8x8xf32>
    %57 = tpu.matmul %56, %41, %cst_33 {dimension_numbers = #tpu.dot_dimension_numbers<[1], [0], [0], [1], [0, 0, 1, 1], [], []>} : vector<8x8xbf16>, vector<8x8xbf16>, vector<8x8xf32> -> vector<8x8xf32>
    %58 = vector.extract_strided_slice %15 {offsets = [0, 16], sizes = [8, 8], strides = [1, 1]} : vector<8x32xbf16> to vector<8x8xbf16>
    %59 = vector.extract_strided_slice %16 {offsets = [0, 16], sizes = [8, 8], strides = [1, 1]} : vector<8x32xbf16> to vector<8x8xbf16>
    %60 = vector.extract_strided_slice %17 {offsets = [0, 16], sizes = [8, 8], strides = [1, 1]} : vector<8x32xbf16> to vector<8x8xbf16>
    %cst_34 = arith.constant dense<0.000000e+00> : vector<8x8xf32>
    %61 = tpu.matmul %58, %59, %cst_34 {dimension_numbers = #tpu.dot_dimension_numbers<[1], [1], [0], [0], [0, 0, 1, 0], [], []>} : vector<8x8xbf16>, vector<8x8xbf16>, vector<8x8xf32> -> vector<8x8xf32>
    %62 = arith.addf %61, %19 : vector<8x8xf32>
    %cst_35 = arith.constant dense<0xFF800000> : vector<8xf32>
    %63 = vector.multi_reduction <maximumf>, %62, %cst_35 [1] : vector<8x8xf32> to vector<8xf32>
    %64 = vector.shape_cast %63 : vector<8xf32> to vector<8x1xf32>
    %65 = vector.broadcast %64 : vector<8x1xf32> to vector<8x8xf32>
    %66 = arith.subf %62, %65 : vector<8x8xf32>
    %67 = math.exp %66 : vector<8x8xf32>
    %cst_36 = arith.constant dense<0.000000e+00> : vector<8xf32>
    %68 = vector.multi_reduction <add>, %67, %cst_36 [1] : vector<8x8xf32> to vector<8xf32>
    %69 = vector.shape_cast %68 : vector<8xf32> to vector<8x1xf32>
    %70 = vector.broadcast %69 : vector<8x1xf32> to vector<8x8xf32>
    %71 = arith.divf %67, %70 : vector<8x8xf32>
    %c2 = arith.constant 2 : index
    %c0_37 = arith.constant 0 : index
    %c0_38 = arith.constant 0 : index
    %c0_39 = arith.constant 0 : index
    %72 = vector.load %arg14[%c2, %c0_37, %c0_38, %c0_39] : memref<4x1x8x8xf32, #tpu.memory_space<vmem>>, vector<1x1x8x8xf32>
    %73 = vector.shape_cast %72 : vector<1x1x8x8xf32> to vector<8x8xf32>
    %74 = vector.shape_cast %71 : vector<8x8xf32> to vector<1x1x8x8xf32>
    tpu.vector_store %arg14[%c2, %c0_37, %c0_38, %c0_39], %74 {strides = array<i32>} : memref<4x1x8x8xf32, #tpu.memory_space<vmem>>, vector<1x1x8x8xf32>,
    %75 = arith.truncf %71 : vector<8x8xf32> to vector<8x8xbf16>
    %cst_40 = arith.constant dense<0.000000e+00> : vector<8x8xf32>
    %76 = tpu.matmul %75, %60, %cst_40 {dimension_numbers = #tpu.dot_dimension_numbers<[1], [0], [0], [1], [0, 0, 1, 1], [], []>} : vector<8x8xbf16>, vector<8x8xbf16>, vector<8x8xf32> -> vector<8x8xf32>
    %77 = vector.extract_strided_slice %15 {offsets = [0, 24], sizes = [8, 8], strides = [1, 1]} : vector<8x32xbf16> to vector<8x8xbf16>
    %78 = vector.extract_strided_slice %16 {offsets = [0, 24], sizes = [8, 8], strides = [1, 1]} : vector<8x32xbf16> to vector<8x8xbf16>
    %79 = vector.extract_strided_slice %17 {offsets = [0, 24], sizes = [8, 8], strides = [1, 1]} : vector<8x32xbf16> to vector<8x8xbf16>
    %cst_41 = arith.constant dense<0.000000e+00> : vector<8x8xf32>
    %80 = tpu.matmul %77, %78, %cst_41 {dimension_numbers = #tpu.dot_dimension_numbers<[1], [1], [0], [0], [0, 0, 1, 0], [], []>} : vector<8x8xbf16>, vector<8x8xbf16>, vector<8x8xf32> -> vector<8x8xf32>
    %81 = arith.addf %80, %19 : vector<8x8xf32>
    %cst_42 = arith.constant dense<0xFF800000> : vector<8xf32>
    %82 = vector.multi_reduction <maximumf>, %81, %cst_42 [1] : vector<8x8xf32> to vector<8xf32>
    %83 = vector.shape_cast %82 : vector<8xf32> to vector<8x1xf32>
    %84 = vector.broadcast %83 : vector<8x1xf32> to vector<8x8xf32>
    %85 = arith.subf %81, %84 : vector<8x8xf32>
    %86 = math.exp %85 : vector<8x8xf32>
    %cst_43 = arith.constant dense<0.000000e+00> : vector<8xf32>
    %87 = vector.multi_reduction <add>, %86, %cst_43 [1] : vector<8x8xf32> to vector<8xf32>
    %88 = vector.shape_cast %87 : vector<8xf32> to vector<8x1xf32>
    %89 = vector.broadcast %88 : vector<8x1xf32> to vector<8x8xf32>
    %90 = arith.divf %86, %89 : vector<8x8xf32>
    %c3 = arith.constant 3 : index
    %c0_44 = arith.constant 0 : index
    %c0_45 = arith.constant 0 : index
    %c0_46 = arith.constant 0 : index
    %91 = vector.load %arg14[%c3, %c0_44, %c0_45, %c0_46] : memref<4x1x8x8xf32, #tpu.memory_space<vmem>>, vector<1x1x8x8xf32>
    %92 = vector.shape_cast %91 : vector<1x1x8x8xf32> to vector<8x8xf32>
    %93 = vector.shape_cast %90 : vector<8x8xf32> to vector<1x1x8x8xf32>
    tpu.vector_store %arg14[%c3, %c0_44, %c0_45, %c0_46], %93 {strides = array<i32>} : memref<4x1x8x8xf32, #tpu.memory_space<vmem>>, vector<1x1x8x8xf32>,
    %94 = arith.truncf %90 : vector<8x8xf32> to vector<8x8xbf16>
    %cst_47 = arith.constant dense<0.000000e+00> : vector<8x8xf32>
    %95 = tpu.matmul %94, %79, %cst_47 {dimension_numbers = #tpu.dot_dimension_numbers<[1], [0], [0], [1], [0, 0, 1, 1], [], []>} : vector<8x8xbf16>, vector<8x8xbf16>, vector<8x8xf32> -> vector<8x8xf32>
    %96 = tpu.concatenate %38, %57, %76, %95 in 1 : vector<8x8xf32>, vector<8x8xf32>, vector<8x8xf32>, vector<8x8xf32> -> vector<8x32xf32>
    %c0_48 = arith.constant 0 : index
    %c0_49 = arith.constant 0 : index
    %97 = vector.load %arg10[%c0_48, %c0_49] : memref<1x32xf32, #tpu.memory_space<vmem>>, vector<1x32xf32>
    %98 = vector.broadcast %97 : vector<1x32xf32> to vector<8x32xf32>
    %99 = arith.addf %1, %98 : vector<8x32xf32>
    %100 = arith.truncf %96 : vector<8x32xf32> to vector<8x32xbf16>
    %c0_50 = arith.constant 0 : index
    %c0_51 = arith.constant 0 : index
    %101 = vector.load %arg9[%c0_50, %c0_51] : memref<32x32xbf16, #tpu.memory_space<vmem>>, vector<32x32xbf16>
    %cst_52 = arith.constant dense<0.000000e+00> : vector<8x32xf32>
    %102 = tpu.matmul %100, %101, %cst_52 {dimension_numbers = #tpu.dot_dimension_numbers<[1], [0], [0], [1], [0, 0, 1, 1], [], []>} : vector<8x32xbf16>, vector<32x32xbf16>, vector<8x32xf32> -> vector<8x32xf32>
    %103 = arith.addf %99, %102 : vector<8x32xf32>
    %cst_53 = arith.constant dense<0.000000e+00> : vector<8xf32>
    %104 = vector.multi_reduction <add>, %103, %cst_53 [1] : vector<8x32xf32> to vector<8xf32>
    %105 = vector.shape_cast %104 : vector<8xf32> to vector<8x1xf32>
    %cst_54 = arith.constant 3.200000e+01 : f32
    %106 = vector.broadcast %cst_54 : f32 to vector<8x1xf32>
    %107 = arith.divf %105, %106 : vector<8x1xf32>
    %108 = vector.broadcast %107 : vector<8x1xf32> to vector<8x32xf32>
    %109 = arith.subf %103, %108 : vector<8x32xf32>
    %110 = vector.broadcast %107 : vector<8x1xf32> to vector<8x32xf32>
    %111 = arith.subf %103, %110 : vector<8x32xf32>
    %112 = arith.mulf %109, %111 : vector<8x32xf32>
    %cst_55 = arith.constant dense<0.000000e+00> : vector<8xf32>
    %113 = vector.multi_reduction <add>, %112, %cst_55 [1] : vector<8x32xf32> to vector<8xf32>
    %114 = vector.shape_cast %113 : vector<8xf32> to vector<8x1xf32>
    %cst_56 = arith.constant 3.200000e+01 : f32
    %115 = vector.broadcast %cst_56 : f32 to vector<8x1xf32>
    %116 = arith.divf %114, %115 : vector<8x1xf32>
    %117 = vector.broadcast %107 : vector<8x1xf32> to vector<8x32xf32>
    %118 = arith.subf %103, %117 : vector<8x32xf32>
    %cst_57 = arith.constant 9.99999974E-6 : f32
    %119 = vector.broadcast %cst_57 : f32 to vector<8x1xf32>
    %120 = arith.addf %116, %119 : vector<8x1xf32>
    %121 = math.rsqrt %120 : vector<8x1xf32>
    %122 = vector.broadcast %121 : vector<8x1xf32> to vector<8x32xf32>
    %123 = arith.mulf %118, %122 : vector<8x32xf32>
    %c0_58 = arith.constant 0 : index
    %c0_59 = arith.constant 0 : index
    %124 = vector.load %arg11[%c0_58, %c0_59] : memref<1x32xf32, #tpu.memory_space<vmem>>, vector<1x32xf32>
    %125 = vector.broadcast %124 : vector<1x32xf32> to vector<8x32xf32>
    %126 = arith.mulf %123, %125 : vector<8x32xf32>
    %c0_60 = arith.constant 0 : index
    %c0_61 = arith.constant 0 : index
    %127 = vector.load %arg12[%c0_60, %c0_61] : memref<1x32xf32, #tpu.memory_space<vmem>>, vector<1x32xf32>
    %128 = vector.broadcast %127 : vector<1x32xf32> to vector<8x32xf32>
    %129 = arith.addf %126, %128 : vector<8x32xf32>
    %c0_62 = arith.constant 0 : index
    %c0_63 = arith.constant 0 : index
    %c0_64 = arith.constant 0 : index
    %130 = vector.load %arg13[%c0_62, %c0_63, %c0_64] : memref<1x8x32xf32, #tpu.memory_space<vmem>>, vector<1x8x32xf32>
    %131 = vector.shape_cast %130 : vector<1x8x32xf32> to vector<8x32xf32>
    %132 = vector.shape_cast %129 : vector<8x32xf32> to vector<1x8x32xf32>
    tpu.vector_store %arg13[%c0_62, %c0_63, %c0_64], %132 {strides = array<i32>} : memref<1x8x32xf32, #tpu.memory_space<vmem>>, vector<1x8x32xf32>,
    return
  }
  func.func @transform_0(%arg0: i32, %arg1: i32) -> (i32, i32, i32) {
    %c0_i32 = arith.constant 0 : i32
    %c0_i32_0 = arith.constant 0 : i32
    return %arg0, %arg1, %c0_i32 : i32, i32, i32
  }
  func.func @transform_1(%arg0: i32, %arg1: i32) -> (i32, i32, i32) {
    %c0_i32 = arith.constant 0 : i32
    %c0_i32_0 = arith.constant 0 : i32
    %c0_i32_1 = arith.constant 0 : i32
    return %arg0, %c0_i32, %c0_i32_0 : i32, i32, i32
  }
  func.func @transform_2(%arg0: i32, %arg1: i32) -> (i32, i32, i32) {
    %c0_i32 = arith.constant 0 : i32
    %c0_i32_0 = arith.constant 0 : i32
    %c0_i32_1 = arith.constant 0 : i32
    return %arg0, %c0_i32, %c0_i32_0 : i32, i32, i32
  }
  func.func @transform_3(%arg0: i32, %arg1: i32) -> (i32, i32, i32) {
    %c0_i32 = arith.constant 0 : i32
    %c0_i32_0 = arith.constant 0 : i32
    %c0_i32_1 = arith.constant 0 : i32
    return %c0_i32, %arg1, %c0_i32_0 : i32, i32, i32
  }
  func.func @transform_4(%arg0: i32, %arg1: i32) -> (i32, i32) {
    %c0_i32 = arith.constant 0 : i32
    %c0_i32_0 = arith.constant 0 : i32
    %c0_i32_1 = arith.constant 0 : i32
    return %c0_i32, %c0_i32_0 : i32, i32
  }
  func.func @transform_5(%arg0: i32, %arg1: i32) -> (i32, i32) {
    %c0_i32 = arith.constant 0 : i32
    %c0_i32_0 = arith.constant 0 : i32
    %c0_i32_1 = arith.constant 0 : i32
    return %c0_i32, %c0_i32_0 : i32, i32
  }
  func.func @transform_6(%arg0: i32, %arg1: i32) -> (i32, i32) {
    %c0_i32 = arith.constant 0 : i32
    %c0_i32_0 = arith.constant 0 : i32
    %c0_i32_1 = arith.constant 0 : i32
    return %c0_i32, %c0_i32_0 : i32, i32
  }
  func.func @transform_7(%arg0: i32, %arg1: i32) -> (i32, i32) {
    %c0_i32 = arith.constant 0 : i32
    %c0_i32_0 = arith.constant 0 : i32
    %c0_i32_1 = arith.constant 0 : i32
    return %c0_i32, %c0_i32_0 : i32, i32
  }
  func.func @transform_8(%arg0: i32, %arg1: i32) -> (i32, i32) {
    %c0_i32 = arith.constant 0 : i32
    %c0_i32_0 = arith.constant 0 : i32
    %c0_i32_1 = arith.constant 0 : i32
    return %c0_i32, %c0_i32_0 : i32, i32
  }
  func.func @transform_9(%arg0: i32, %arg1: i32) -> (i32, i32) {
    %c0_i32 = arith.constant 0 : i32
    %c0_i32_0 = arith.constant 0 : i32
    %c0_i32_1 = arith.constant 0 : i32
    return %c0_i32, %c0_i32_0 : i32, i32
  }
  func.func @transform_10(%arg0: i32, %arg1: i32) -> (i32, i32) {
    %c0_i32 = arith.constant 0 : i32
    %c0_i32_0 = arith.constant 0 : i32
    %c0_i32_1 = arith.constant 0 : i32
    return %c0_i32, %c0_i32_0 : i32, i32
  }
  func.func @transform_11(%arg0: i32, %arg1: i32) -> (i32, i32, i32) {
    %c0_i32 = arith.constant 0 : i32
    %c0_i32_0 = arith.constant 0 : i32
    return %arg0, %arg1, %c0_i32 : i32, i32, i32
  }
  func.func @transform_12(%arg0: i32, %arg1: i32) -> (i32, i32, i32, i32) {
    %c0_i32 = arith.constant 0 : i32
    %c0_i32_0 = arith.constant 0 : i32
    %c0_i32_1 = arith.constant 0 : i32
    return %c0_i32, %arg0, %arg1, %c0_i32_0 : i32, i32, i32, i32
  }
}

</mosaic_0001>

<llo_original>
// kernel: tpu_custom_call.1
$region0: #{tpu_custom_call.1}
  #allocation0 [shape = 'u32[]', space=smem, size = 0x4, offset = 0x4, fixed_abs, tag = 'smem constant byte address 0x4 - core index']
  #allocation1 [shape = 'u32[144,128]{1,0:T(1,128)}', space=vmem, size = 0x12000, scoped, tag = 'internal scratch']
  %s0 = inlined_call_operand.hbm [shape: f32[2,8,32], index: 0, kind: input, shape index: {}]
  %s1 = inlined_call_operand.hbm [shape: f32[2,8,32], index: 1, kind: input, shape index: {}]
  %s2 = inlined_call_operand.hbm [shape: f32[2,8,32], index: 2, kind: input, shape index: {}]
  %s3 = inlined_call_operand.hbm [shape: f32[1,8,8], index: 3, kind: input, shape index: {}]
  %s4 = inlined_call_operand.hbm [shape: bf16[32,32], index: 4, kind: input, shape index: {}]
  %s5 = inlined_call_operand.hbm [shape: bf16[32,32], index: 5, kind: input, shape index: {}]
  %s6 = inlined_call_operand.hbm [shape: bf16[32,32], index: 6, kind: input, shape index: {}]
  %s7 = inlined_call_operand.hbm [shape: bf16[32,32], index: 7, kind: input, shape index: {}]
  %s8 = inlined_call_operand.vmem [shape: f32[1,32], index: 8, kind: input, shape index: {}]
  %s9 = inlined_call_operand.vmem [shape: f32[1,32], index: 9, kind: input, shape index: {}]
  %s10 = inlined_call_operand.vmem [shape: f32[1,32], index: 10, kind: input, shape index: {}]
  %s11 = inlined_call_operand.hbm [shape: f32[2,8,32], index: 11, kind: output, shape index: {0}]
  %s12 = inlined_call_operand.hbm [shape: f32[4,2,8,8], index: 12, kind: output, shape index: {1}]
  %13 = xla_tuple %s11, %s12
  %s14 = sld [smem:[#allocation0]]
  $region117: #{tpu_custom_call.1} parent=0
    _
  %s16 = ssub.s32 1, %s14
  %s17 = scalar_select 0, %s16, %s14
  $region1: #{tpu_custom_call.1} parent=0
    #allocation2 [shape = 'u8[8192]{0}', space=vmem, size = 0x2000, scoped, tag = 'input window, operand 0']
    #allocation3 [shape = 's32[2]{0}', space=sflag, size = 0x8, scoped, tag = 'scoped memory for tpu_custom_call.1']
    #allocation4 [shape = 's32[2]{0}', space=sflag, size = 0x8, scoped, tag = 'scoped memory for tpu_custom_call.1']
    #allocation5 [shape = 'u8[8192]{0}', space=vmem, size = 0x2000, scoped, tag = 'input window, operand 1']
    #allocation6 [shape = 's32[2]{0}', space=sflag, size = 0x8, scoped, tag = 'scoped memory for tpu_custom_call.1']
    #allocation7 [shape = 'u8[8192]{0}', space=vmem, size = 0x2000, scoped, tag = 'input window, operand 2']
    #allocation8 [shape = 'u8[4096]{0}', space=vmem, size = 0x1000, scoped, tag = 'input window, operand 3, single buffered']
    #allocation9 [shape = 's32[1]{0}', space=sflag, size = 0x4, scoped, tag = 'scoped memory for tpu_custom_call.1']
    #allocation10 [shape = 'u8[8192]{0}', space=vmem, size = 0x2000, scoped, tag = 'input window, operand 4, single buffered']
    #allocation11 [shape = 'u8[8192]{0}', space=vmem, size = 0x2000, scoped, tag = 'input window, operand 5, single buffered']
    #allocation12 [shape = 's32[1]{0}', space=sflag, size = 0x4, scoped, tag = 'scoped memory for tpu_custom_call.1']
    #allocation13 [shape = 'u8[8192]{0}', space=vmem, size = 0x2000, scoped, tag = 'input window, operand 6, single buffered']
    #allocation14 [shape = 'u8[8192]{0}', space=vmem, size = 0x2000, scoped, tag = 'input window, operand 7, single buffered']
    #allocation15 [shape = 's32[1]{0}', space=sflag, size = 0x4, scoped, tag = 'scoped memory for tpu_custom_call.1']
    #allocation16 [shape = 'u8[8192]{0}', space=vmem, size = 0x2000, scoped, tag = 'output window, operand 0']
    #allocation17 [shape = 'u8[32768]{0}', space=vmem, size = 0x8000, scoped, tag = 'output window, operand 1']
    #allocation18 [shape = 's32[2]{0}', space=sflag, size = 0x8, scoped, tag = 'scoped memory for tpu_custom_call.1']
    %18 = vsyncpa [#allocation3], 0
    %s19 = scalar_lea.sflag [#allocation3], 1
    %20 = vsyncpa %s19, 0
    %21 = vsyncpa [#allocation6], 0
    %s22 = scalar_lea.sflag [#allocation6], 1
    %23 = vsyncpa %s22, 0
    %24 = vsyncpa [#allocation9], 0
    %25 = vsyncpa [#allocation12], 0
    %26 = vsyncpa [#allocation15], 0
    %27 = vsyncpa [#allocation4], 0
    %s28 = scalar_lea.sflag [#allocation4], 1
    %29 = vsyncpa %s28, 0
    %30 = vsyncpa [#allocation18], 0
    %s31 = scalar_lea.sflag [#allocation18], 1
    %32 = vsyncpa %s31, 0
    loop: start=0, step=1, limit=4
    $region2: #{tpu_custom_call.1} parent=1 // loop_pre_header
      _
    $region3: #{tpu_custom_call.1} parent=1 // loop_header
      %s34 = sphi 0, %s38
      %p35 = scmp.ge.s32.totalorder %s34, 4
      %s41 = sphi 0, %s53
      %s42 = sphi 0, %s49
      %s43 = sphi 0, %s41
      %s44 = sphi 0, %s42
      %s45 = sphi 0, %s43
      %s46 = sphi 0, %s44
      %s58 = sphi 0, %s60
      %s61 = sphi 0, %s58
      %s62 = sphi 0, %s61
      %s78 = sphi 0, %s62
      %s84 = sphi 0, %s86
      %s87 = sphi 0, %s84
      %s88 = sphi 0, %s87
      %s104 = sphi 0, %s88
      %s110 = sphi 0, %s112
      %s113 = sphi 0, %s110
      %s114 = sphi 0, %s113
      %s130 = sphi 0, %s114
      %s136 = sphi 0, %s138
      %s139 = sphi 0, %s136
      %s140 = sphi 0, %s139
      %s156 = sphi 0, %s140
      %s160 = sphi 0, %s160
      %s162 = sphi 0, %s160
      %s163 = sphi 0, %s162
      %s177 = sphi 0, %s163
      %s181 = sphi 0, %s181
      %s183 = sphi 0, %s181
      %s184 = sphi 0, %s183
      %s198 = sphi 0, %s184
      %s202 = sphi 0, %s202
      %s204 = sphi 0, %s202
      %s205 = sphi 0, %s204
      %s219 = sphi 0, %s205
      %s223 = sphi 0, %s223
      %s225 = sphi 0, %s223
      %s226 = sphi 0, %s225
      %s240 = sphi 0, %s226
      %s244 = sphi 0, %s244
      %s246 = sphi 0, %s244
      %s247 = sphi 0, %s246
      %s261 = sphi 0, %s247
      %s265 = sphi 0, %s265
      %s267 = sphi 0, %s265
      %s268 = sphi 0, %s267
      %s282 = sphi 0, %s268
      %s286 = sphi 0, %s286
      %s288 = sphi 0, %s286
      %s289 = sphi 0, %s288
      %s303 = sphi 0, %s289
      %s311 = sphi 0, %s313
      %s314 = sphi 0, %s311
      %s315 = sphi 0, %s314
      %s331 = sphi 0, %s315
      %s339 = sphi 0, %s341
      %s342 = sphi 0, %s339
      %s343 = sphi 0, %s342
      %s359 = sphi 0, %s343
    $region4: #{tpu_custom_call.1} parent=1 // loop_header_branch
      %37 = sbr.rel (%p35) target = $region8
    $region5: #{tpu_custom_call.1} parent=1 // loop_body
      %s39 = ssub.s32 %s34, 1
      %s40 = ssub.s32 %s34, 2
      %s47 = sadd.s32 1, %s42
      %p48 = scmp.ge.s32.totalorder %s47, 1
      %s49 = scalar_select %p48, 0, %s47
      %s50 = sadd.s32 1, %s41
      %s51 = scalar_select %p48, %s50, %s41
      %p52 = scmp.ge.s32.totalorder %s51, 2
      %s53 = scalar_select %p52, 0, %s51
      %s54 = ssub.s32 %s41, %s53
      %s55 = ssub.s32 %s42, %s49
      %s56 = sor.u32 %s54, %s55
      %p57 = scmp.eq.s32.totalorder %s56, 0
      %s59 = sadd.s32 %s58, 1
      %s60 = scalar_select %p57, %s58, %s59
      %p63 = pneg %p57
      %p64 = scmp.eq.s32.totalorder %s34, 1
      %p65 = por %p63, %p64
      %p66 = scmp.ne.s32.totalorder %s58, %s61
      %p67 = scmp.eq.s32.totalorder %s34, 0
      %p68 = por %p66, %p67
      %p69 = scmp.ne.s32.totalorder %s58, %s61
      %p70 = scmp.eq.s32.totalorder %s39, 1
      %p71 = por %p69, %p70
      %p72 = scmp.ne.s32.totalorder %s61, %s62
      %p73 = scmp.eq.s32.totalorder %s39, 0
      %p74 = por %p72, %p73
      %p75 = scmp.ne.s32.totalorder %s61, %s62
      %p76 = scmp.eq.s32.totalorder %s40, 1
      %p77 = por %p75, %p76
      %p79 = scmp.ne.s32.totalorder %s62, %s78
      %p80 = scmp.eq.s32.totalorder %s40, 0
      %p81 = por %p79, %p80
      %s82 = ssub.s32 %s41, %s53
      %p83 = scmp.eq.s32.totalorder %s82, 0
      %s85 = sadd.s32 %s84, 1
      %s86 = scalar_select %p83, %s84, %s85
      %p89 = pneg %p83
      %p90 = scmp.eq.s32.totalorder %s34, 1
      %p91 = por %p89, %p90
      %p92 = scmp.ne.s32.totalorder %s84, %s87
      %p93 = scmp.eq.s32.totalorder %s34, 0
      %p94 = por %p92, %p93
      %p95 = scmp.ne.s32.totalorder %s84, %s87
      %p96 = scmp.eq.s32.totalorder %s39, 1
      %p97 = por %p95, %p96
      %p98 = scmp.ne.s32.totalorder %s87, %s88
      %p99 = scmp.eq.s32.totalorder %s39, 0
      %p100 = por %p98, %p99
      %p101 = scmp.ne.s32.totalorder %s87, %s88
      %p102 = scmp.eq.s32.totalorder %s40, 1
      %p103 = por %p101, %p102
      %p105 = scmp.ne.s32.totalorder %s88, %s104
      %p106 = scmp.eq.s32.totalorder %s40, 0
      %p107 = por %p105, %p106
      %s108 = ssub.s32 %s41, %s53
      %p109 = scmp.eq.s32.totalorder %s108, 0
      %s111 = sadd.s32 %s110, 1
      %s112 = scalar_select %p109, %s110, %s111
      %p115 = pneg %p109
      %p116 = scmp.eq.s32.totalorder %s34, 1
      %p117 = por %p115, %p116
      %p118 = scmp.ne.s32.totalorder %s110, %s113
      %p119 = scmp.eq.s32.totalorder %s34, 0
      %p120 = por %p118, %p119
      %p121 = scmp.ne.s32.totalorder %s110, %s113
      %p122 = scmp.eq.s32.totalorder %s39, 1
      %p123 = por %p121, %p122
      %p124 = scmp.ne.s32.totalorder %s113, %s114
      %p125 = scmp.eq.s32.totalorder %s39, 0
      %p126 = por %p124, %p125
      %p127 = scmp.ne.s32.totalorder %s113, %s114
      %p128 = scmp.eq.s32.totalorder %s40, 1
      %p129 = por %p127, %p128
      %p131 = scmp.ne.s32.totalorder %s114, %s130
      %p132 = scmp.eq.s32.totalorder %s40, 0
      %p133 = por %p131, %p132
      %s134 = ssub.s32 %s42, %s49
      %p135 = scmp.eq.s32.totalorder %s134, 0
      %s137 = sadd.s32 %s136, 1
      %s138 = scalar_select %p135, %s136, %s137
      %p141 = pneg %p135
      %p142 = scmp.eq.s32.totalorder %s34, 1
      %p143 = por %p141, %p142
      %p144 = scmp.ne.s32.totalorder %s136, %s139
      %p145 = scmp.eq.s32.totalorder %s34, 0
      %p146 = por %p144, %p145
      %p147 = scmp.ne.s32.totalorder %s136, %s139
      %p148 = scmp.eq.s32.totalorder %s39, 1
      %p149 = por %p147, %p148
      %p150 = scmp.ne.s32.totalorder %s139, %s140
      %p151 = scmp.eq.s32.totalorder %s39, 0
      %p152 = por %p150, %p151
      %p153 = scmp.ne.s32.totalorder %s139, %s140
      %p154 = scmp.eq.s32.totalorder %s40, 1
      %p155 = por %p153, %p154
      %p157 = scmp.ne.s32.totalorder %s140, %s156
      %p158 = scmp.eq.s32.totalorder %s40, 0
      %p159 = por %p157, %p158
      %s161 = sadd.s32 %s160, 1
      %p164 = scmp.eq.s32.totalorder %s34, 1
      %p165 = scmp.ne.s32.totalorder %s160, %s162
      %p166 = scmp.eq.s32.totalorder %s34, 0
      %p167 = por %p165, %p166
      %p168 = scmp.ne.s32.totalorder %s160, %s162
      %p169 = scmp.eq.s32.totalorder %s39, 1
      %p170 = por %p168, %p169
      %p171 = scmp.ne.s32.totalorder %s162, %s163
      %p172 = scmp.eq.s32.totalorder %s39, 0
      %p173 = por %p171, %p172
      %p174 = scmp.ne.s32.totalorder %s162, %s163
      %p175 = scmp.eq.s32.totalorder %s40, 1
      %p176 = por %p174, %p175
      %p178 = scmp.ne.s32.totalorder %s163, %s177
      %p179 = scmp.eq.s32.totalorder %s40, 0
      %p180 = por %p178, %p179
      %s182 = sadd.s32 %s181, 1
      %p185 = scmp.eq.s32.totalorder %s34, 1
      %p186 = scmp.ne.s32.totalorder %s181, %s183
      %p187 = scmp.eq.s32.totalorder %s34, 0
      %p188 = por %p186, %p187
      %p189 = scmp.ne.s32.totalorder %s181, %s183
      %p190 = scmp.eq.s32.totalorder %s39, 1
      %p191 = por %p189, %p190
      %p192 = scmp.ne.s32.totalorder %s183, %s184
      %p193 = scmp.eq.s32.totalorder %s39, 0
      %p194 = por %p192, %p193
      %p195 = scmp.ne.s32.totalorder %s183, %s184
      %p196 = scmp.eq.s32.totalorder %s40, 1
      %p197 = por %p195, %p196
      %p199 = scmp.ne.s32.totalorder %s184, %s198
      %p200 = scmp.eq.s32.totalorder %s40, 0
      %p201 = por %p199, %p200
      %s203 = sadd.s32 %s202, 1
      %p206 = scmp.eq.s32.totalorder %s34, 1
      %p207 = scmp.ne.s32.totalorder %s202, %s204
      %p208 = scmp.eq.s32.totalorder %s34, 0
      %p209 = por %p207, %p208
      %p210 = scmp.ne.s32.totalorder %s202, %s204
      %p211 = scmp.eq.s32.totalorder %s39, 1
      %p212 = por %p210, %p211
      %p213 = scmp.ne.s32.totalorder %s204, %s205
      %p214 = scmp.eq.s32.totalorder %s39, 0
      %p215 = por %p213, %p214
      %p216 = scmp.ne.s32.totalorder %s204, %s205
      %p217 = scmp.eq.s32.totalorder %s40, 1
      %p218 = por %p216, %p217
      %p220 = scmp.ne.s32.totalorder %s205, %s219
      %p221 = scmp.eq.s32.totalorder %s40, 0
      %p222 = por %p220, %p221
      %s224 = sadd.s32 %s223, 1
      %p227 = scmp.eq.s32.totalorder %s34, 1
      %p228 = scmp.ne.s32.totalorder %s223, %s225
      %p229 = scmp.eq.s32.totalorder %s34, 0
      %p230 = por %p228, %p229
      %p231 = scmp.ne.s32.totalorder %s223, %s225
      %p232 = scmp.eq.s32.totalorder %s39, 1
      %p233 = por %p231, %p232
      %p234 = scmp.ne.s32.totalorder %s225, %s226
      %p235 = scmp.eq.s32.totalorder %s39, 0
      %p236 = por %p234, %p235
      %p237 = scmp.ne.s32.totalorder %s225, %s226
      %p238 = scmp.eq.s32.totalorder %s40, 1
      %p239 = por %p237, %p238
      %p241 = scmp.ne.s32.totalorder %s226, %s240
      %p242 = scmp.eq.s32.totalorder %s40, 0
      %p243 = por %p241, %p242
      %s245 = sadd.s32 %s244, 1
      %p248 = scmp.eq.s32.totalorder %s34, 1
      %p249 = scmp.ne.s32.totalorder %s244, %s246
      %p250 = scmp.eq.s32.totalorder %s34, 0
      %p251 = por %p249, %p250
      %p252 = scmp.ne.s32.totalorder %s244, %s246
      %p253 = scmp.eq.s32.totalorder %s39, 1
      %p254 = por %p252, %p253
      %p255 = scmp.ne.s32.totalorder %s246, %s247
      %p256 = scmp.eq.s32.totalorder %s39, 0
      %p257 = por %p255, %p256
      %p258 = scmp.ne.s32.totalorder %s246, %s247
      %p259 = scmp.eq.s32.totalorder %s40, 1
      %p260 = por %p258, %p259
      %p262 = scmp.ne.s32.totalorder %s247, %s261
      %p263 = scmp.eq.s32.totalorder %s40, 0
      %p264 = por %p262, %p263
      %s266 = sadd.s32 %s265, 1
      %p269 = scmp.eq.s32.totalorder %s34, 1
      %p270 = scmp.ne.s32.totalorder %s265, %s267
      %p271 = scmp.eq.s32.totalorder %s34, 0
      %p272 = por %p270, %p271
      %p273 = scmp.ne.s32.totalorder %s265, %s267
      %p274 = scmp.eq.s32.totalorder %s39, 1
      %p275 = por %p273, %p274
      %p276 = scmp.ne.s32.totalorder %s267, %s268
      %p277 = scmp.eq.s32.totalorder %s39, 0
      %p278 = por %p276, %p277
      %p279 = scmp.ne.s32.totalorder %s267, %s268
      %p280 = scmp.eq.s32.totalorder %s40, 1
      %p281 = por %p279, %p280
      %p283 = scmp.ne.s32.totalorder %s268, %s282
      %p284 = scmp.eq.s32.totalorder %s40, 0
      %p285 = por %p283, %p284
      %s287 = sadd.s32 %s286, 1
      %p290 = scmp.eq.s32.totalorder %s34, 1
      %p291 = scmp.ne.s32.totalorder %s286, %s288
      %p292 = scmp.eq.s32.totalorder %s34, 0
      %p293 = por %p291, %p292
      %p294 = scmp.ne.s32.totalorder %s286, %s288
      %p295 = scmp.eq.s32.totalorder %s39, 1
      %p296 = por %p294, %p295
      %p297 = scmp.ne.s32.totalorder %s288, %s289
      %p298 = scmp.eq.s32.totalorder %s39, 0
      %p299 = por %p297, %p298
      %p300 = scmp.ne.s32.totalorder %s288, %s289
      %p301 = scmp.eq.s32.totalorder %s40, 1
      %p302 = por %p300, %p301
      %p304 = scmp.ne.s32.totalorder %s289, %s303
      %p305 = scmp.eq.s32.totalorder %s40, 0
      %p306 = por %p304, %p305
      %s307 = ssub.s32 %s41, %s53
      %s308 = ssub.s32 %s42, %s49
      %s309 = sor.u32 %s307, %s308
      %p310 = scmp.eq.s32.totalorder %s309, 0
      %s312 = sadd.s32 %s311, 1
      %s313 = scalar_select %p310, %s311, %s312
      %p316 = pneg %p310
      %p317 = scmp.eq.s32.totalorder %s34, 1
      %p318 = por %p316, %p317
      %p319 = scmp.ne.s32.totalorder %s311, %s314
      %p320 = scmp.eq.s32.totalorder %s34, 0
      %p321 = por %p319, %p320
      %p322 = scmp.ne.s32.totalorder %s311, %s314
      %p323 = scmp.eq.s32.totalorder %s39, 1
      %p324 = por %p322, %p323
      %p325 = scmp.ne.s32.totalorder %s314, %s315
      %p326 = scmp.eq.s32.totalorder %s39, 0
      %p327 = por %p325, %p326
      %p328 = scmp.ne.s32.totalorder %s314, %s315
      %p329 = scmp.eq.s32.totalorder %s40, 1
      %p330 = por %p328, %p329
      %p332 = scmp.ne.s32.totalorder %s315, %s331
      %p333 = scmp.eq.s32.totalorder %s40, 0
      %p334 = por %p332, %p333
      %s335 = ssub.s32 %s41, %s53
      %s336 = ssub.s32 %s42, %s49
      %s337 = sor.u32 %s335, %s336
      %p338 = scmp.eq.s32.totalorder %s337, 0
      %s340 = sadd.s32 %s339, 1
      %s341 = scalar_select %p338, %s339, %s340
      %p344 = pneg %p338
      %p345 = scmp.eq.s32.totalorder %s34, 1
      %p346 = por %p344, %p345
      %p347 = scmp.ne.s32.totalorder %s339, %s342
      %p348 = scmp.eq.s32.totalorder %s34, 0
      %p349 = por %p347, %p348
      %p350 = scmp.ne.s32.totalorder %s339, %s342
      %p351 = scmp.eq.s32.totalorder %s39, 1
      %p352 = por %p350, %p351
      %p353 = scmp.ne.s32.totalorder %s342, %s343
      %p354 = scmp.eq.s32.totalorder %s39, 0
      %p355 = por %p353, %p354
      %p356 = scmp.ne.s32.totalorder %s342, %s343
      %p357 = scmp.eq.s32.totalorder %s40, 1
      %p358 = por %p356, %p357
      %p360 = scmp.ne.s32.totalorder %s343, %s359
      %p361 = scmp.eq.s32.totalorder %s40, 0
      %p362 = por %p360, %p361
      %p363 = scmp.le.s32.totalorder 1, %s34
      %p364 = scmp.lt.s32.totalorder %s34, 3
      %p365 = pnand %p363, %p364
      %p366 = pneg %p365
      // Predicated region
      $region9: #{tpu_custom_call.1} parent=5 // pred_check
        _
      $region10: #{tpu_custom_call.1} parent=5 // pred_check_branch
        %368 = sbr.rel (%p365) target = $region12
      $region11: #{tpu_custom_call.1} parent=5 // pred_region
        %s369 = ssub.s32 %s34, 1
        // Predicated region
        $region13: #{tpu_custom_call.1} parent=11 // pred_check
          %p370 = pneg %p152
        $region14: #{tpu_custom_call.1} parent=11 // pred_check_branch
          %372 = sbr.rel (%p370) target = $region16
        $region15: #{tpu_custom_call.1} parent=11 // pred_region
          %s374 = ssub.s32 128, 128
          %375 = vsyncadd [#allocation9], %s374
          %s376 = smul.addr %s44, 128
          %s377 = scalar_lea.hbm %s3, %s376
          %s379 = sshll.u32 [#allocation8], 4
          %s380 = int_to_ptr.vmem [resolvable:$true] %s379
          %382 = dma.hbm_to_vmem [thread:$0]  %s377, 128, %s380, [#allocation9]
        $region16: #{tpu_custom_call.1} parent=11 // pred_fallthru
          _
        // Predicated region
        $region17: #{tpu_custom_call.1} parent=11 // pred_check
          %p383 = pneg %p173
        $region18: #{tpu_custom_call.1} parent=11 // pred_check_branch
          %385 = sbr.rel (%p383) target = $region20
        $region19: #{tpu_custom_call.1} parent=11 // pred_region
          %s387 = ssub.s32 256, 256
          %388 = vsyncadd [#allocation9], %s387
          %s389 = sshll.u32 [#allocation10], 4
          %s390 = int_to_ptr.vmem [resolvable:$true] %s389
          %395 = dma.hbm_to_vmem [thread:$0]  %s4, 256, %s390, [#allocation9], 64, 64, 4
        $region20: #{tpu_custom_call.1} parent=11 // pred_fallthru
          _
        // Predicated region
        $region21: #{tpu_custom_call.1} parent=11 // pred_check
          %p396 = pneg %p194
        $region22: #{tpu_custom_call.1} parent=11 // pred_check_branch
          %398 = sbr.rel (%p396) target = $region24
        $region23: #{tpu_custom_call.1} parent=11 // pred_region
          %s400 = ssub.s32 256, 256
          %401 = vsyncadd [#allocation12], %s400
          %s402 = sshll.u32 [#allocation11], 4
          %s403 = int_to_ptr.vmem [resolvable:$true] %s402
          %408 = dma.hbm_to_vmem [thread:$0]  %s5, 256, %s403, [#allocation12], 64, 64, 4
        $region24: #{tpu_custom_call.1} parent=11 // pred_fallthru
          _
        // Predicated region
        $region25: #{tpu_custom_call.1} parent=11 // pred_check
          %p409 = pneg %p215
        $region26: #{tpu_custom_call.1} parent=11 // pred_check_branch
          %411 = sbr.rel (%p409) target = $region28
        $region27: #{tpu_custom_call.1} parent=11 // pred_region
          %s413 = ssub.s32 256, 256
          %414 = vsyncadd [#allocation12], %s413
          %s415 = sshll.u32 [#allocation13], 4
          %s416 = int_to_ptr.vmem [resolvable:$true] %s415
          %421 = dma.hbm_to_vmem [thread:$0]  %s6, 256, %s416, [#allocation12], 64, 64, 4
        $region28: #{tpu_custom_call.1} parent=11 // pred_fallthru
          _
        // Predicated region
        $region29: #{tpu_custom_call.1} parent=11 // pred_check
          %p422 = pneg %p236
        $region30: #{tpu_custom_call.1} parent=11 // pred_check_branch
          %424 = sbr.rel (%p422) target = $region32
        $region31: #{tpu_custom_call.1} parent=11 // pred_region
          %s426 = ssub.s32 256, 256
          %427 = vsyncadd [#allocation15], %s426
          %s428 = sshll.u32 [#allocation14], 4
          %s429 = int_to_ptr.vmem [resolvable:$true] %s428
          %434 = dma.hbm_to_vmem [thread:$0]  %s7, 256, %s429, [#allocation15], 64, 64, 4
        $region32: #{tpu_custom_call.1} parent=11 // pred_fallthru
          _
        // Predicated region
        $region33: #{tpu_custom_call.1} parent=11 // pred_check
          %p435 = pneg %p257
        $region34: #{tpu_custom_call.1} parent=11 // pred_check_branch
          %437 = sbr.rel (%p435) target = $region36
        $region35: #{tpu_custom_call.1} parent=11 // pred_region
          _
        $region36: #{tpu_custom_call.1} parent=11 // pred_fallthru
          _
        // Predicated region
        $region37: #{tpu_custom_call.1} parent=11 // pred_check
          %p438 = pneg %p278
        $region38: #{tpu_custom_call.1} parent=11 // pred_check_branch
          %440 = sbr.rel (%p438) target = $region40
        $region39: #{tpu_custom_call.1} parent=11 // pred_region
          _
        $region40: #{tpu_custom_call.1} parent=11 // pred_fallthru
          _
        // Predicated region
        $region41: #{tpu_custom_call.1} parent=11 // pred_check
          %p441 = pneg %p299
        $region42: #{tpu_custom_call.1} parent=11 // pred_check_branch
          %443 = sbr.rel (%p441) target = $region44
        $region43: #{tpu_custom_call.1} parent=11 // pred_region
          _
        $region44: #{tpu_custom_call.1} parent=11 // pred_fallthru
          _
      $region12: #{tpu_custom_call.1} parent=5 // pred_fallthru
        _
      %p444 = scmp.lt.s32.totalorder %s34, 2
      // Predicated region
      $region45: #{tpu_custom_call.1} parent=5 // pred_check
        %p445 = pneg %p444
      $region46: #{tpu_custom_call.1} parent=5 // pred_check_branch
        %447 = sbr.rel (%p445) target = $region48
      $region47: #{tpu_custom_call.1} parent=5 // pred_region
        // Predicated region
        $region49: #{tpu_custom_call.1} parent=47 // pred_check
          %p448 = pneg %p68
        $region50: #{tpu_custom_call.1} parent=47 // pred_check_branch
          %450 = sbr.rel (%p448) target = $region52
        $region51: #{tpu_custom_call.1} parent=47 // pred_region
          %s451 = sand.u32 %s58, 1
          %s452 = scalar_lea.sflag [#allocation3], %s451
          %s453 = sand.u32 %s58, 1
          %s454 = smul.addr %s453, 8
          %s455 = scalar_lea.vmem [#allocation2], %s454
          %s457 = ssub.s32 128, 128
          %458 = vsyncadd %s452, %s457
          %s459 = sadd.s32 %s42, %s41
          %s460 = smul.addr %s459, 128
          %s461 = scalar_lea.hbm %s0, %s460
          %s463 = sshll.u32 %s455, 4
          %s464 = int_to_ptr.vmem [resolvable:$true] %s463
          %466 = dma.hbm_to_vmem [thread:$0]  %s461, 128, %s464, %s452
        $region52: #{tpu_custom_call.1} parent=47 // pred_fallthru
          _
        // Predicated region
        $region53: #{tpu_custom_call.1} parent=47 // pred_check
          %p467 = pneg %p94
        $region54: #{tpu_custom_call.1} parent=47 // pred_check_branch
          %469 = sbr.rel (%p467) target = $region56
        $region55: #{tpu_custom_call.1} parent=47 // pred_region
          %s470 = sand.u32 %s34, 1
          %s471 = scalar_lea.sflag [#allocation6], %s470
          %s472 = sand.u32 %s84, 1
          %s473 = smul.addr %s472, 8
          %s474 = scalar_lea.vmem [#allocation5], %s473
          %s476 = ssub.s32 128, 128
          %477 = vsyncadd %s471, %s476
          %s478 = smul.addr %s41, 128
          %s479 = scalar_lea.hbm %s1, %s478
          %s481 = sshll.u32 %s474, 4
          %s482 = int_to_ptr.vmem [resolvable:$true] %s481
          %484 = dma.hbm_to_vmem [thread:$0]  %s479, 128, %s482, %s471
        $region56: #{tpu_custom_call.1} parent=47 // pred_fallthru
          _
        // Predicated region
        $region57: #{tpu_custom_call.1} parent=47 // pred_check
          %p485 = pneg %p120
        $region58: #{tpu_custom_call.1} parent=47 // pred_check_branch
          %487 = sbr.rel (%p485) target = $region60
        $region59: #{tpu_custom_call.1} parent=47 // pred_region
          %s488 = sand.u32 %s34, 1
          %s489 = scalar_lea.sflag [#allocation6], %s488
          %s490 = sand.u32 %s110, 1
          %s491 = smul.addr %s490, 8
          %s492 = scalar_lea.vmem [#allocation7], %s491
          %s494 = ssub.s32 128, 128
          %495 = vsyncadd %s489, %s494
          %s496 = smul.addr %s41, 128
          %s497 = scalar_lea.hbm %s2, %s496
          %s499 = sshll.u32 %s492, 4
          %s500 = int_to_ptr.vmem [resolvable:$true] %s499
          %502 = dma.hbm_to_vmem [thread:$0]  %s497, 128, %s500, %s489
        $region60: #{tpu_custom_call.1} parent=47 // pred_fallthru
          _
      $region48: #{tpu_custom_call.1} parent=5 // pred_fallthru
        _
      %p503 = scmp.le.s32.totalorder 1, %s34
      %p504 = scmp.lt.s32.totalorder %s34, 3
      %p505 = pnand %p503, %p504
      %p506 = pneg %p505
      // Predicated region
      $region61: #{tpu_custom_call.1} parent=5 // pred_check
        _
      $region62: #{tpu_custom_call.1} parent=5 // pred_check_branch
        %508 = sbr.rel (%p505) target = $region64
      $region63: #{tpu_custom_call.1} parent=5 // pred_region
        %s509 = ssub.s32 %s34, 1
        %s510 = sand.u32 %s61, 1
        %s511 = scalar_lea.sflag [#allocation3], %s510
        %s512 = sand.u32 %s61, 1
        %s513 = smul.addr %s512, 8
        %s514 = scalar_lea.vmem [#allocation2], %s513
        // Predicated region
        $region65: #{tpu_custom_call.1} parent=63 // pred_check
          %p515 = pneg %p74
        $region66: #{tpu_custom_call.1} parent=63 // pred_check_branch
          %517 = sbr.rel (%p515) target = $region68
        $region67: #{tpu_custom_call.1} parent=63 // pred_region
          %518 = dma.done %s511, 128
        $region68: #{tpu_custom_call.1} parent=63 // pred_fallthru
          _
        %s519 = sand.u32 %s39, 1
        %s520 = scalar_lea.sflag [#allocation6], %s519
        %s521 = sand.u32 %s87, 1
        %s522 = smul.addr %s521, 8
        %s523 = scalar_lea.vmem [#allocation5], %s522
        // Predicated region
        $region69: #{tpu_custom_call.1} parent=63 // pred_check
          %p524 = pneg %p100
        $region70: #{tpu_custom_call.1} parent=63 // pred_check_branch
          %526 = sbr.rel (%p524) target = $region72
        $region71: #{tpu_custom_call.1} parent=63 // pred_region
          %527 = dma.done %s520, 128
        $region72: #{tpu_custom_call.1} parent=63 // pred_fallthru
          _
        %s528 = sand.u32 %s39, 1
        %s529 = scalar_lea.sflag [#allocation6], %s528
        %s530 = sand.u32 %s113, 1
        %s531 = smul.addr %s530, 8
        %s532 = scalar_lea.vmem [#allocation7], %s531
        // Predicated region
        $region73: #{tpu_custom_call.1} parent=63 // pred_check
          %p533 = pneg %p126
        $region74: #{tpu_custom_call.1} parent=63 // pred_check_branch
          %535 = sbr.rel (%p533) target = $region76
        $region75: #{tpu_custom_call.1} parent=63 // pred_region
          %536 = dma.done %s529, 128
        $region76: #{tpu_custom_call.1} parent=63 // pred_fallthru
          _
        // Predicated region
        $region77: #{tpu_custom_call.1} parent=63 // pred_check
          %p537 = pneg %p152
        $region78: #{tpu_custom_call.1} parent=63 // pred_check_branch
          %539 = sbr.rel (%p537) target = $region80
        $region79: #{tpu_custom_call.1} parent=63 // pred_region
          %540 = dma.done [#allocation9], 128
        $region80: #{tpu_custom_call.1} parent=63 // pred_fallthru
          _
        // Predicated region
        $region81: #{tpu_custom_call.1} parent=63 // pred_check
          %p541 = pneg %p173
        $region82: #{tpu_custom_call.1} parent=63 // pred_check_branch
          %543 = sbr.rel (%p541) target = $region84
        $region83: #{tpu_custom_call.1} parent=63 // pred_region
          %544 = dma.done [#allocation9], 256
        $region84: #{tpu_custom_call.1} parent=63 // pred_fallthru
          _
        // Predicated region
        $region85: #{tpu_custom_call.1} parent=63 // pred_check
          %p545 = pneg %p194
        $region86: #{tpu_custom_call.1} parent=63 // pred_check_branch
          %547 = sbr.rel (%p545) target = $region88
        $region87: #{tpu_custom_call.1} parent=63 // pred_region
          %548 = dma.done [#allocation12], 256
        $region88: #{tpu_custom_call.1} parent=63 // pred_fallthru
          _
        // Predicated region
        $region89: #{tpu_custom_call.1} parent=63 // pred_check
          %p549 = pneg %p215
        $region90: #{tpu_custom_call.1} parent=63 // pred_check_branch
          %551 = sbr.rel (%p549) target = $region92
        $region91: #{tpu_custom_call.1} parent=63 // pred_region
          %552 = dma.done [#allocation12], 256
        $region92: #{tpu_custom_call.1} parent=63 // pred_fallthru
          _
        // Predicated region
        $region93: #{tpu_custom_call.1} parent=63 // pred_check
          %p553 = pneg %p236
        $region94: #{tpu_custom_call.1} parent=63 // pred_check_branch
          %555 = sbr.rel (%p553) target = $region96
        $region95: #{tpu_custom_call.1} parent=63 // pred_region
          %556 = dma.done [#allocation15], 256
        $region96: #{tpu_custom_call.1} parent=63 // pred_fallthru
          _
        %s557 = sand.u32 %s61, 1
        %s558 = scalar_lea.sflag [#allocation3], %s557
        %s559 = sand.u32 %s61, 1
        %s560 = smul.addr %s559, 8
        %s561 = scalar_lea.vmem [#allocation2], %s560
        %p562 = pneg %p74
        %p563 = pneg %p71
        %s564 = sand.u32 %s39, 1
        %s565 = scalar_lea.sflag [#allocation6], %s564
        %s566 = sand.u32 %s87, 1
        %s567 = smul.addr %s566, 8
        %s568 = scalar_lea.vmem [#allocation5], %s567
        %p569 = pneg %p100
        %p570 = pneg %p97
        %s571 = sand.u32 %s39, 1
        %s572 = scalar_lea.sflag [#allocation6], %s571
        %s573 = sand.u32 %s113, 1
        %s574 = smul.addr %s573, 8
        %s575 = scalar_lea.vmem [#allocation7], %s574
        %p576 = pneg %p126
        %p577 = pneg %p123
        %p578 = pneg %p152
        %p579 = pneg %p149
        %p580 = pneg %p173
        %p581 = pneg %p170
        %p582 = pneg %p194
        %p583 = pneg %p191
        %p584 = pneg %p215
        %p585 = pneg %p212
        %p586 = pneg %p236
        %p587 = pneg %p233
        %p588 = pneg %p257
        %p589 = pneg %p254
        %p590 = pneg %p278
        %p591 = pneg %p275
        %p592 = pneg %p299
        %p593 = pneg %p296
        %p594 = pneg %p327
        %p595 = pneg %p324
        %s596 = sand.u32 %s314, 1
        %s597 = scalar_lea.sflag [#allocation4], %s596
        %s598 = sand.u32 %s314, 1
        %s599 = smul.addr %s598, 8
        %s600 = scalar_lea.vmem [#allocation16], %s599
        %p601 = pneg %p355
        %p602 = pneg %p352
        %s603 = sand.u32 %s342, 1
        %s604 = scalar_lea.sflag [#allocation18], %s603
        %s605 = sand.u32 %s342, 1
        %s606 = smul.addr %s605, 32
        %s607 = scalar_lea.vmem [#allocation17], %s606
        %v609 = vld [vmem:[%s514] sm:$0xff]
        %v610 = vld [vmem:[%s523] sm:$0xff]
        %v611 = vld [vmem:[%s532] sm:$0xff]
        %v612 = vpack.c.bf16 %v609, %v609
        %v613 = vld [vmem:[#allocation10] sm:$0xf]
        %v614 = vld [vmem:[#allocation10 + $0x4] sm:$0xf]
        %v615 = vld [vmem:[#allocation10 + $0x8] sm:$0xf]
        %v616 = vld [vmem:[#allocation10 + $0xc] sm:$0xf]
        %v621 = vunpack.c.l.b16 %v613
        %v622 = vunpack.c.l.b16 %v614
        %v623 = vunpack.c.l.b16 %v615
        %v624 = vunpack.c.l.b16 %v616
        %v625 = vpack.c.b16 %v622, %v621
        %v626 = vpack.c.b16 %v624, %v623
        %vm629 = vcmask 261120
        %v631 = vsel %vm629, %v612, 0
        %633 = vmatprep.subr.bf16.mxu0 0
        %634 = vmatpush1.bf16.msra.mxu0 0
        %635 = vmatprep.subr.bf16.mxu0 0
        %636 = vmatpush1.bf16.msra.mxu0 0
        %637 = vmatprep.subr.bf16.mxu0 0
        %638 = vmatpush1.bf16.msra.mxu0 0
        %639 = vmatprep.subr.bf16.mxu0 0
        %640 = vmatpush1.bf16.msra.mxu0 0
        %641 = vmatprep.subr.bf16.mxu0 0
        %642 = vmatpush1.bf16.msra.mxu0 0
        %643 = vmatprep.subr.bf16.mxu0 0
        %644 = vmatpush1.bf16.msra.mxu0 0
        %645 = vmatprep.subr.bf16.mxu0 0
        %646 = vmatpush1.bf16.msra.mxu0 %v626
        %647 = vmatprep.subr.bf16.mxu0 0
        %648 = vmatpush1.bf16.msra.mxu0 %v625
        %649 = vmatprep.subr.bf16.mxu0 0
        %650 = vmatpush2.bf16.msra.mxu0 0
        %651 = vmatprep.subr.bf16.mxu0 0
        %652 = vmatpush2.bf16.msra.mxu0 0
        %653 = vmatprep.subr.bf16.mxu0 0
        %654 = vmatpush2.bf16.msra.mxu0 0
        %655 = vmatprep.subr.bf16.mxu0 0
        %656 = vmatpush2.bf16.msra.mxu0 0
        %657 = vmatprep.subr.bf16.mxu0 0
        %658 = vmatpush2.bf16.msra.mxu0 0
        %659 = vmatprep.subr.bf16.mxu0 0
        %660 = vmatpush2.bf16.msra.mxu0 0
        %661 = vmatprep.subr.bf16.mxu0 0
        %662 = vmatpush2.bf16.msra.mxu0 0
        %663 = vmatprep.subr.bf16.mxu0 0
        %664 = vmatpush2.bf16.msra.mxu0 0
        %665 = vmatprep.mubr.bf16.mxu0 0
        %666 = vmatmul.mubr.bf16.gmra.mxu0 %v631
        %v667 = vpop.f32.mrf.mxu0
        %v668 = vadd.f32 0.0, %v667
        %v669 = vpop.f32.mrf.mxu0
        %v670 = vpop.f32.mrf.mxu0
        %v671 = vpop.f32.mrf.mxu0
        %672 = vdwg.mxu0
        %v673 = vpack.c.bf16 %v610, %v610
        %v674 = vld [vmem:[#allocation11] sm:$0xf]
        %v675 = vld [vmem:[#allocation11 + $0x4] sm:$0xf]
        %v676 = vld [vmem:[#allocation11 + $0x8] sm:$0xf]
        %v677 = vld [vmem:[#allocation11 + $0xc] sm:$0xf]
        %v682 = vunpack.c.l.b16 %v674
        %v683 = vunpack.c.l.b16 %v675
        %v684 = vunpack.c.l.b16 %v676
        %v685 = vunpack.c.l.b16 %v677
        %v686 = vpack.c.b16 %v683, %v682
        %v687 = vpack.c.b16 %v685, %v684
        %v691 = vsel %vm629, %v673, 0
        %693 = vmatprep.subr.bf16.mxu0 0
        %694 = vmatpush1.bf16.msra.mxu0 0
        %695 = vmatprep.subr.bf16.mxu0 0
        %696 = vmatpush1.bf16.msra.mxu0 0
        %697 = vmatprep.subr.bf16.mxu0 0
        %698 = vmatpush1.bf16.msra.mxu0 0
        %699 = vmatprep.subr.bf16.mxu0 0
        %700 = vmatpush1.bf16.msra.mxu0 0
        %701 = vmatprep.subr.bf16.mxu0 0
        %702 = vmatpush1.bf16.msra.mxu0 0
        %703 = vmatprep.subr.bf16.mxu0 0
        %704 = vmatpush1.bf16.msra.mxu0 0
        %705 = vmatprep.subr.bf16.mxu0 0
        %706 = vmatpush1.bf16.msra.mxu0 %v687
        %707 = vmatprep.subr.bf16.mxu0 0
        %708 = vmatpush1.bf16.msra.mxu0 %v686
        %709 = vmatprep.subr.bf16.mxu0 0
        %710 = vmatpush2.bf16.msra.mxu0 0
        %711 = vmatprep.subr.bf16.mxu0 0
        %712 = vmatpush2.bf16.msra.mxu0 0
        %713 = vmatprep.subr.bf16.mxu0 0
        %714 = vmatpush2.bf16.msra.mxu0 0
        %715 = vmatprep.subr.bf16.mxu0 0
        %716 = vmatpush2.bf16.msra.mxu0 0
        %717 = vmatprep.subr.bf16.mxu0 0
        %718 = vmatpush2.bf16.msra.mxu0 0
        %719 = vmatprep.subr.bf16.mxu0 0
        %720 = vmatpush2.bf16.msra.mxu0 0
        %721 = vmatprep.subr.bf16.mxu0 0
        %722 = vmatpush2.bf16.msra.mxu0 0
        %723 = vmatprep.subr.bf16.mxu0 0
        %724 = vmatpush2.bf16.msra.mxu0 0
        %725 = vmatprep.mubr.bf16.mxu0 0
        %726 = vmatmul.mubr.bf16.gmra.mxu0 %v691
        %v727 = vpop.f32.mrf.mxu0
        %v728 = vadd.f32 0.0, %v727
        %v729 = vpop.f32.mrf.mxu0
        %v730 = vpop.f32.mrf.mxu0
        %v731 = vpop.f32.mrf.mxu0
        %732 = vdwg.mxu0
        %v733 = vpack.c.bf16 %v611, %v611
        %v734 = vld [vmem:[#allocation13] sm:$0xf]
        %v735 = vld [vmem:[#allocation13 + $0x4] sm:$0xf]
        %v736 = vld [vmem:[#allocation13 + $0x8] sm:$0xf]
        %v737 = vld [vmem:[#allocation13 + $0xc] sm:$0xf]
        %v742 = vunpack.c.l.b16 %v734
        %v743 = vunpack.c.l.b16 %v735
        %v744 = vunpack.c.l.b16 %v736
        %v745 = vunpack.c.l.b16 %v737
        %v746 = vpack.c.b16 %v743, %v742
        %v747 = vpack.c.b16 %v745, %v744
        %v751 = vsel %vm629, %v733, 0
        %753 = vmatprep.subr.bf16.mxu0 0
        %754 = vmatpush1.bf16.msra.mxu0 0
        %755 = vmatprep.subr.bf16.mxu0 0
        %756 = vmatpush1.bf16.msra.mxu0 0
        %757 = vmatprep.subr.bf16.mxu0 0
        %758 = vmatpush1.bf16.msra.mxu0 0
        %759 = vmatprep.subr.bf16.mxu0 0
        %760 = vmatpush1.bf16.msra.mxu0 0
        %761 = vmatprep.subr.bf16.mxu0 0
        %762 = vmatpush1.bf16.msra.mxu0 0
        %763 = vmatprep.subr.bf16.mxu0 0
        %764 = vmatpush1.bf16.msra.mxu0 0
        %765 = vmatprep.subr.bf16.mxu0 0
        %766 = vmatpush1.bf16.msra.mxu0 %v747
        %767 = vmatprep.subr.bf16.mxu0 0
        %768 = vmatpush1.bf16.msra.mxu0 %v746
        %769 = vmatprep.subr.bf16.mxu0 0
        %770 = vmatpush2.bf16.msra.mxu0 0
        %771 = vmatprep.subr.bf16.mxu0 0
        %772 = vmatpush2.bf16.msra.mxu0 0
        %773 = vmatprep.subr.bf16.mxu0 0
        %774 = vmatpush2.bf16.msra.mxu0 0
        %775 = vmatprep.subr.bf16.mxu0 0
        %776 = vmatpush2.bf16.msra.mxu0 0
        %777 = vmatprep.subr.bf16.mxu0 0
        %778 = vmatpush2.bf16.msra.mxu0 0
        %779 = vmatprep.subr.bf16.mxu0 0
        %780 = vmatpush2.bf16.msra.mxu0 0
        %781 = vmatprep.subr.bf16.mxu0 0
        %782 = vmatpush2.bf16.msra.mxu0 0
        %783 = vmatprep.subr.bf16.mxu0 0
        %784 = vmatpush2.bf16.msra.mxu0 0
        %785 = vmatprep.mubr.bf16.mxu0 0
        %786 = vmatmul.mubr.bf16.gmra.mxu0 %v751
        %v787 = vpop.f32.mrf.mxu0
        %v788 = vadd.f32 0.0, %v787
        %v789 = vpop.f32.mrf.mxu0
        %v790 = vpop.f32.mrf.mxu0
        %v791 = vpop.f32.mrf.mxu0
        %792 = vdwg.mxu0
        %v793 = vpack.c.bf16 %v668, %v668
        %v794 = vpack.c.bf16 %v728, %v728
        %v795 = vpack.c.bf16 %v788, %v788
        %v796 = vld [vmem:[#allocation8] sm:$0xff]
        %vm797 = vcmask 64512
        %v799 = vsel %vm797, %v793, 0
        %v802 = vsel %vm797, %v794, 0
        %804 = vmatprep.subr.bf16.mxu0 0
        %805 = vmatpush1.bf16.xpose.msra.mxu0 0
        %806 = vmatprep.subr.bf16.mxu0 0
        %807 = vmatpush1.bf16.xpose.msra.mxu0 0
        %808 = vmatprep.subr.bf16.mxu0 0
        %809 = vmatpush1.bf16.xpose.msra.mxu0 0
        %810 = vmatprep.subr.bf16.mxu0 0
        %811 = vmatpush1.bf16.xpose.msra.mxu0 0
        %812 = vmatprep.subr.bf16.mxu0 0
        %813 = vmatpush1.bf16.xpose.msra.mxu0 0
        %814 = vmatprep.subr.bf16.mxu0 0
        %815 = vmatpush1.bf16.xpose.msra.mxu0 0
        %816 = vmatprep.subr.bf16.mxu0 0
        %817 = vmatpush1.bf16.xpose.msra.mxu0 0
        %818 = vmatprep.subr.bf16.mxu0 0
        %819 = vmatpush1.bf16.xpose.msra.mxu0 %v802
        %820 = vmatprep.subr.bf16.mxu0 0
        %821 = vmatpush2.bf16.xpose.msra.mxu0 0
        %822 = vmatprep.subr.bf16.mxu0 0
        %823 = vmatpush2.bf16.xpose.msra.mxu0 0
        %824 = vmatprep.subr.bf16.mxu0 0
        %825 = vmatpush2.bf16.xpose.msra.mxu0 0
        %826 = vmatprep.subr.bf16.mxu0 0
        %827 = vmatpush2.bf16.xpose.msra.mxu0 0
        %828 = vmatprep.subr.bf16.mxu0 0
        %829 = vmatpush2.bf16.xpose.msra.mxu0 0
        %830 = vmatprep.subr.bf16.mxu0 0
        %831 = vmatpush2.bf16.xpose.msra.mxu0 0
        %832 = vmatprep.subr.bf16.mxu0 0
        %833 = vmatpush2.bf16.xpose.msra.mxu0 0
        %834 = vmatprep.subr.bf16.mxu0 0
        %835 = vmatpush2.bf16.xpose.msra.mxu0 0
        %836 = vmatprep.mubr.bf16.mxu0 0
        %837 = vmatmul.mubr.bf16.gmra.mxu0 %v799
        %v838 = vpop.f32.mrf.mxu0
        %v839 = vadd.f32 %v796, %v838
        %v840 = vpop.f32.mrf.mxu0
        %v841 = vpop.f32.mrf.mxu0
        %v842 = vpop.f32.mrf.mxu0
        %843 = vdwg.mxu0
        %v844 = vsel %vm797, %v839, -inf
        %845 = vmax.xlane.f32.xlu0 %v844
        %v846 = vpop.xlane.xlu0 %845
        %v847 = vsub.f32 %v839, %v846
        %v848 = vmul.f32 %v847, 1.442695
        %v849 = vpow.pop %v848
        %v850 = vsel %vm797, %v849, 0.0
        %851 = vadd.xlane.f32.xlu0 %v850
        %v852 = vpop.xlane.xlu0 %851
        %v853 = vrcp.pop %v852
        %v854 = vmul.f32 %v849, %v853
        %855 = vst.msk [vmem:[%s607] sm:$0xff] %vm797, %v854
        %v856 = vpack.c.bf16 %v854, %v854
        %v858 = vsel %vm797, %v856, 0
        %vm860 = vcmask 1043456
        %v862 = vsel %vm860, %v795, 0
        %864 = vmatprep.subr.bf16.mxu0 0
        %865 = vmatpush1.bf16.msra.mxu0 0
        %866 = vmatprep.subr.bf16.mxu0 0
        %867 = vmatpush1.bf16.msra.mxu0 0
        %868 = vmatprep.subr.bf16.mxu0 0
        %869 = vmatpush1.bf16.msra.mxu0 0
        %870 = vmatprep.subr.bf16.mxu0 0
        %871 = vmatpush1.bf16.msra.mxu0 0
        %872 = vmatprep.subr.bf16.mxu0 0
        %873 = vmatpush1.bf16.msra.mxu0 0
        %874 = vmatprep.subr.bf16.mxu0 0
        %875 = vmatpush1.bf16.msra.mxu0 0
        %876 = vmatprep.subr.bf16.mxu0 0
        %877 = vmatpush1.bf16.msra.mxu0 0
        %878 = vmatprep.subr.bf16.mxu0 0
        %879 = vmatpush1.bf16.msra.mxu0 %v862
        %880 = vmatprep.subr.bf16.mxu0 0
        %881 = vmatpush2.bf16.msra.mxu0 0
        %882 = vmatprep.subr.bf16.mxu0 0
        %883 = vmatpush2.bf16.msra.mxu0 0
        %884 = vmatprep.subr.bf16.mxu0 0
        %885 = vmatpush2.bf16.msra.mxu0 0
        %886 = vmatprep.subr.bf16.mxu0 0
        %887 = vmatpush2.bf16.msra.mxu0 0
        %888 = vmatprep.subr.bf16.mxu0 0
        %889 = vmatpush2.bf16.msra.mxu0 0
        %890 = vmatprep.subr.bf16.mxu0 0
        %891 = vmatpush2.bf16.msra.mxu0 0
        %892 = vmatprep.subr.bf16.mxu0 0
        %893 = vmatpush2.bf16.msra.mxu0 0
        %894 = vmatprep.subr.bf16.mxu0 0
        %895 = vmatpush2.bf16.msra.mxu0 0
        %896 = vmatprep.mubr.bf16.mxu0 0
        %897 = vmatmul.mubr.bf16.gmra.mxu0 %v858
        %v898 = vpop.f32.mrf.mxu0
        %v899 = vadd.f32 0.0, %v898
        %v900 = vpop.f32.mrf.mxu0
        %v901 = vpop.f32.mrf.mxu0
        %v902 = vpop.f32.mrf.mxu0
        %903 = vdwg.mxu0
        %905 = vrot.lane.b32.xlu0 %v793, 120
        %v906 = vpop.permute.xlu0 %905
        %908 = vrot.lane.b32.xlu0 %v794, 120
        %v909 = vpop.permute.xlu0 %908
        %v911 = vsel %vm797, %v906, 0
        %v914 = vsel %vm797, %v909, 0
        %916 = vmatprep.subr.bf16.mxu0 0
        %917 = vmatpush1.bf16.xpose.msra.mxu0 0
        %918 = vmatprep.subr.bf16.mxu0 0
        %919 = vmatpush1.bf16.xpose.msra.mxu0 0
        %920 = vmatprep.subr.bf16.mxu0 0
        %921 = vmatpush1.bf16.xpose.msra.mxu0 0
        %922 = vmatprep.subr.bf16.mxu0 0
        %923 = vmatpush1.bf16.xpose.msra.mxu0 0
        %924 = vmatprep.subr.bf16.mxu0 0
        %925 = vmatpush1.bf16.xpose.msra.mxu0 0
        %926 = vmatprep.subr.bf16.mxu0 0
        %927 = vmatpush1.bf16.xpose.msra.mxu0 0
        %928 = vmatprep.subr.bf16.mxu0 0
        %929 = vmatpush1.bf16.xpose.msra.mxu0 0
        %930 = vmatprep.subr.bf16.mxu0 0
        %931 = vmatpush1.bf16.xpose.msra.mxu0 %v914
        %932 = vmatprep.subr.bf16.mxu0 0
        %933 = vmatpush2.bf16.xpose.msra.mxu0 0
        %934 = vmatprep.subr.bf16.mxu0 0
        %935 = vmatpush2.bf16.xpose.msra.mxu0 0
        %936 = vmatprep.subr.bf16.mxu0 0
        %937 = vmatpush2.bf16.xpose.msra.mxu0 0
        %938 = vmatprep.subr.bf16.mxu0 0
        %939 = vmatpush2.bf16.xpose.msra.mxu0 0
        %940 = vmatprep.subr.bf16.mxu0 0
        %941 = vmatpush2.bf16.xpose.msra.mxu0 0
        %942 = vmatprep.subr.bf16.mxu0 0
        %943 = vmatpush2.bf16.xpose.msra.mxu0 0
        %944 = vmatprep.subr.bf16.mxu0 0
        %945 = vmatpush2.bf16.xpose.msra.mxu0 0
        %946 = vmatprep.subr.bf16.mxu0 0
        %947 = vmatpush2.bf16.xpose.msra.mxu0 0
        %948 = vmatprep.mubr.bf16.mxu0 0
        %949 = vmatmul.mubr.bf16.gmra.mxu0 %v911
        %v950 = vpop.f32.mrf.mxu0
        %v951 = vadd.f32 %v796, %v950
        %v952 = vpop.f32.mrf.mxu0
        %v953 = vpop.f32.mrf.mxu0
        %v954 = vpop.f32.mrf.mxu0
        %955 = vdwg.mxu0
        %v956 = vsel %vm797, %v951, -inf
        %957 = vmax.xlane.f32.xlu0 %v956
        %v958 = vpop.xlane.xlu0 %957
        %v959 = vsub.f32 %v951, %v958
        %v960 = vmul.f32 %v959, 1.442695
        %v961 = vpow.pop %v960
        %v962 = vsel %vm797, %v961, 0.0
        %963 = vadd.xlane.f32.xlu0 %v962
        %v964 = vpop.xlane.xlu0 %963
        %v965 = vrcp.pop %v964
        %v966 = vmul.f32 %v961, %v965
        %s967 = scalar_lea.vmem %s607, 8 [#allocation17]
        %968 = vst.msk [vmem:[%s967] sm:$0xff] %vm797, %v966
        %v969 = vpack.c.bf16 %v966, %v966
        %971 = vrot.lane.b32.xlu0 %v795, 120
        %v972 = vpop.permute.xlu0 %971
        %v974 = vsel %vm797, %v969, 0
        %v977 = vsel %vm860, %v972, 0
        %979 = vmatprep.subr.bf16.mxu0 0
        %980 = vmatpush1.bf16.msra.mxu0 0
        %981 = vmatprep.subr.bf16.mxu0 0
        %982 = vmatpush1.bf16.msra.mxu0 0
        %983 = vmatprep.subr.bf16.mxu0 0
        %984 = vmatpush1.bf16.msra.mxu0 0
        %985 = vmatprep.subr.bf16.mxu0 0
        %986 = vmatpush1.bf16.msra.mxu0 0
        %987 = vmatprep.subr.bf16.mxu0 0
        %988 = vmatpush1.bf16.msra.mxu0 0
        %989 = vmatprep.subr.bf16.mxu0 0
        %990 = vmatpush1.bf16.msra.mxu0 0
        %991 = vmatprep.subr.bf16.mxu0 0
        %992 = vmatpush1.bf16.msra.mxu0 0
        %993 = vmatprep.subr.bf16.mxu0 0
        %994 = vmatpush1.bf16.msra.mxu0 %v977
        %995 = vmatprep.subr.bf16.mxu0 0
        %996 = vmatpush2.bf16.msra.mxu0 0
        %997 = vmatprep.subr.bf16.mxu0 0
        %998 = vmatpush2.bf16.msra.mxu0 0
        %999 = vmatprep.subr.bf16.mxu0 0
        %1000 = vmatpush2.bf16.msra.mxu0 0
        %1001 = vmatprep.subr.bf16.mxu0 0
        %1002 = vmatpush2.bf16.msra.mxu0 0
        %1003 = vmatprep.subr.bf16.mxu0 0
        %1004 = vmatpush2.bf16.msra.mxu0 0
        %1005 = vmatprep.subr.bf16.mxu0 0
        %1006 = vmatpush2.bf16.msra.mxu0 0
        %1007 = vmatprep.subr.bf16.mxu0 0
        %1008 = vmatpush2.bf16.msra.mxu0 0
        %1009 = vmatprep.subr.bf16.mxu0 0
        %1010 = vmatpush2.bf16.msra.mxu0 0
        %1011 = vmatprep.mubr.bf16.mxu0 0
        %1012 = vmatmul.mubr.bf16.gmra.mxu0 %v974
        %v1013 = vpop.f32.mrf.mxu0
        %v1014 = vadd.f32 0.0, %v1013
        %v1015 = vpop.f32.mrf.mxu0
        %v1016 = vpop.f32.mrf.mxu0
        %v1017 = vpop.f32.mrf.mxu0
        %1018 = vdwg.mxu0
        %1019 = vrot.lane.b32.xlu0 %v793, 112
        %v1020 = vpop.permute.xlu0 %1019
        %1021 = vrot.lane.b32.xlu0 %v794, 112
        %v1022 = vpop.permute.xlu0 %1021
        %v1024 = vsel %vm797, %v1020, 0
        %v1027 = vsel %vm797, %v1022, 0
        %1029 = vmatprep.subr.bf16.mxu0 0
        %1030 = vmatpush1.bf16.xpose.msra.mxu0 0
        %1031 = vmatprep.subr.bf16.mxu0 0
        %1032 = vmatpush1.bf16.xpose.msra.mxu0 0
        %1033 = vmatprep.subr.bf16.mxu0 0
        %1034 = vmatpush1.bf16.xpose.msra.mxu0 0
        %1035 = vmatprep.subr.bf16.mxu0 0
        %1036 = vmatpush1.bf16.xpose.msra.mxu0 0
        %1037 = vmatprep.subr.bf16.mxu0 0
        %1038 = vmatpush1.bf16.xpose.msra.mxu0 0
        %1039 = vmatprep.subr.bf16.mxu0 0
        %1040 = vmatpush1.bf16.xpose.msra.mxu0 0
        %1041 = vmatprep.subr.bf16.mxu0 0
        %1042 = vmatpush1.bf16.xpose.msra.mxu0 0
        %1043 = vmatprep.subr.bf16.mxu0 0
        %1044 = vmatpush1.bf16.xpose.msra.mxu0 %v1027
        %1045 = vmatprep.subr.bf16.mxu0 0
        %1046 = vmatpush2.bf16.xpose.msra.mxu0 0
        %1047 = vmatprep.subr.bf16.mxu0 0
        %1048 = vmatpush2.bf16.xpose.msra.mxu0 0
        %1049 = vmatprep.subr.bf16.mxu0 0
        %1050 = vmatpush2.bf16.xpose.msra.mxu0 0
        %1051 = vmatprep.subr.bf16.mxu0 0
        %1052 = vmatpush2.bf16.xpose.msra.mxu0 0
        %1053 = vmatprep.subr.bf16.mxu0 0
        %1054 = vmatpush2.bf16.xpose.msra.mxu0 0
        %1055 = vmatprep.subr.bf16.mxu0 0
        %1056 = vmatpush2.bf16.xpose.msra.mxu0 0
        %1057 = vmatprep.subr.bf16.mxu0 0
        %1058 = vmatpush2.bf16.xpose.msra.mxu0 0
        %1059 = vmatprep.subr.bf16.mxu0 0
        %1060 = vmatpush2.bf16.xpose.msra.mxu0 0
        %1061 = vmatprep.mubr.bf16.mxu0 0
        %1062 = vmatmul.mubr.bf16.gmra.mxu0 %v1024
        %v1063 = vpop.f32.mrf.mxu0
        %v1064 = vadd.f32 %v796, %v1063
        %v1065 = vpop.f32.mrf.mxu0
        %v1066 = vpop.f32.mrf.mxu0
        %v1067 = vpop.f32.mrf.mxu0
        %1068 = vdwg.mxu0
        %v1069 = vsel %vm797, %v1064, -inf
        %1070 = vmax.xlane.f32.xlu0 %v1069
        %v1071 = vpop.xlane.xlu0 %1070
        %v1072 = vsub.f32 %v1064, %v1071
        %v1073 = vmul.f32 %v1072, 1.442695
        %v1074 = vpow.pop %v1073
        %v1075 = vsel %vm797, %v1074, 0.0
        %1076 = vadd.xlane.f32.xlu0 %v1075
        %v1077 = vpop.xlane.xlu0 %1076
        %v1078 = vrcp.pop %v1077
        %v1079 = vmul.f32 %v1074, %v1078
        %s1080 = scalar_lea.vmem %s607, 16 [#allocation17]
        %1081 = vst.msk [vmem:[%s1080] sm:$0xff] %vm797, %v1079
        %v1082 = vpack.c.bf16 %v1079, %v1079
        %1083 = vrot.lane.b32.xlu0 %v795, 112
        %v1084 = vpop.permute.xlu0 %1083
        %v1086 = vsel %vm797, %v1082, 0
        %v1089 = vsel %vm860, %v1084, 0
        %1091 = vmatprep.subr.bf16.mxu0 0
        %1092 = vmatpush1.bf16.msra.mxu0 0
        %1093 = vmatprep.subr.bf16.mxu0 0
        %1094 = vmatpush1.bf16.msra.mxu0 0
        %1095 = vmatprep.subr.bf16.mxu0 0
        %1096 = vmatpush1.bf16.msra.mxu0 0
        %1097 = vmatprep.subr.bf16.mxu0 0
        %1098 = vmatpush1.bf16.msra.mxu0 0
        %1099 = vmatprep.subr.bf16.mxu0 0
        %1100 = vmatpush1.bf16.msra.mxu0 0
        %1101 = vmatprep.subr.bf16.mxu0 0
        %1102 = vmatpush1.bf16.msra.mxu0 0
        %1103 = vmatprep.subr.bf16.mxu0 0
        %1104 = vmatpush1.bf16.msra.mxu0 0
        %1105 = vmatprep.subr.bf16.mxu0 0
        %1106 = vmatpush1.bf16.msra.mxu0 %v1089
        %1107 = vmatprep.subr.bf16.mxu0 0
        %1108 = vmatpush2.bf16.msra.mxu0 0
        %1109 = vmatprep.subr.bf16.mxu0 0
        %1110 = vmatpush2.bf16.msra.mxu0 0
        %1111 = vmatprep.subr.bf16.mxu0 0
        %1112 = vmatpush2.bf16.msra.mxu0 0
        %1113 = vmatprep.subr.bf16.mxu0 0
        %1114 = vmatpush2.bf16.msra.mxu0 0
        %1115 = vmatprep.subr.bf16.mxu0 0
        %1116 = vmatpush2.bf16.msra.mxu0 0
        %1117 = vmatprep.subr.bf16.mxu0 0
        %1118 = vmatpush2.bf16.msra.mxu0 0
        %1119 = vmatprep.subr.bf16.mxu0 0
        %1120 = vmatpush2.bf16.msra.mxu0 0
        %1121 = vmatprep.subr.bf16.mxu0 0
        %1122 = vmatpush2.bf16.msra.mxu0 0
        %1123 = vmatprep.mubr.bf16.mxu0 0
        %1124 = vmatmul.mubr.bf16.gmra.mxu0 %v1086
        %v1125 = vpop.f32.mrf.mxu0
        %v1126 = vadd.f32 0.0, %v1125
        %v1127 = vpop.f32.mrf.mxu0
        %v1128 = vpop.f32.mrf.mxu0
        %v1129 = vpop.f32.mrf.mxu0
        %1130 = vdwg.mxu0
        %1131 = vrot.lane.b32.xlu0 %v793, 104
        %v1132 = vpop.permute.xlu0 %1131
        %1133 = vrot.lane.b32.xlu0 %v794, 104
        %v1134 = vpop.permute.xlu0 %1133
        %v1136 = vsel %vm797, %v1132, 0
        %v1139 = vsel %vm797, %v1134, 0
        %1141 = vmatprep.subr.bf16.mxu0 0
        %1142 = vmatpush1.bf16.xpose.msra.mxu0 0
        %1143 = vmatprep.subr.bf16.mxu0 0
        %1144 = vmatpush1.bf16.xpose.msra.mxu0 0
        %1145 = vmatprep.subr.bf16.mxu0 0
        %1146 = vmatpush1.bf16.xpose.msra.mxu0 0
        %1147 = vmatprep.subr.bf16.mxu0 0
        %1148 = vmatpush1.bf16.xpose.msra.mxu0 0
        %1149 = vmatprep.subr.bf16.mxu0 0
        %1150 = vmatpush1.bf16.xpose.msra.mxu0 0
        %1151 = vmatprep.subr.bf16.mxu0 0
        %1152 = vmatpush1.bf16.xpose.msra.mxu0 0
        %1153 = vmatprep.subr.bf16.mxu0 0
        %1154 = vmatpush1.bf16.xpose.msra.mxu0 0
        %1155 = vmatprep.subr.bf16.mxu0 0
        %1156 = vmatpush1.bf16.xpose.msra.mxu0 %v1139
        %1157 = vmatprep.subr.bf16.mxu0 0
        %1158 = vmatpush2.bf16.xpose.msra.mxu0 0
        %1159 = vmatprep.subr.bf16.mxu0 0
        %1160 = vmatpush2.bf16.xpose.msra.mxu0 0
        %1161 = vmatprep.subr.bf16.mxu0 0
        %1162 = vmatpush2.bf16.xpose.msra.mxu0 0
        %1163 = vmatprep.subr.bf16.mxu0 0
        %1164 = vmatpush2.bf16.xpose.msra.mxu0 0
        %1165 = vmatprep.subr.bf16.mxu0 0
        %1166 = vmatpush2.bf16.xpose.msra.mxu0 0
        %1167 = vmatprep.subr.bf16.mxu0 0
        %1168 = vmatpush2.bf16.xpose.msra.mxu0 0
        %1169 = vmatprep.subr.bf16.mxu0 0
        %1170 = vmatpush2.bf16.xpose.msra.mxu0 0
        %1171 = vmatprep.subr.bf16.mxu0 0
        %1172 = vmatpush2.bf16.xpose.msra.mxu0 0
        %1173 = vmatprep.mubr.bf16.mxu0 0
        %1174 = vmatmul.mubr.bf16.gmra.mxu0 %v1136
        %v1175 = vpop.f32.mrf.mxu0
        %v1176 = vadd.f32 %v796, %v1175
        %v1177 = vpop.f32.mrf.mxu0
        %v1178 = vpop.f32.mrf.mxu0
        %v1179 = vpop.f32.mrf.mxu0
        %1180 = vdwg.mxu0
        %v1181 = vsel %vm797, %v1176, -inf
        %1182 = vmax.xlane.f32.xlu0 %v1181
        %v1183 = vpop.xlane.xlu0 %1182
        %v1184 = vsub.f32 %v1176, %v1183
        %v1185 = vmul.f32 %v1184, 1.442695
        %v1186 = vpow.pop %v1185
        %v1187 = vsel %vm797, %v1186, 0.0
        %1188 = vadd.xlane.f32.xlu0 %v1187
        %v1189 = vpop.xlane.xlu0 %1188
        %v1190 = vrcp.pop %v1189
        %v1191 = vmul.f32 %v1186, %v1190
        %s1192 = scalar_lea.vmem %s607, 24 [#allocation17]
        %1193 = vst.msk [vmem:[%s1192] sm:$0xff] %vm797, %v1191
        %v1194 = vpack.c.bf16 %v1191, %v1191
        %1195 = vrot.lane.b32.xlu0 %v795, 104
        %v1196 = vpop.permute.xlu0 %1195
        %v1198 = vsel %vm797, %v1194, 0
        %v1201 = vsel %vm860, %v1196, 0
        %1203 = vmatprep.subr.bf16.mxu0 0
        %1204 = vmatpush1.bf16.msra.mxu0 0
        %1205 = vmatprep.subr.bf16.mxu0 0
        %1206 = vmatpush1.bf16.msra.mxu0 0
        %1207 = vmatprep.subr.bf16.mxu0 0
        %1208 = vmatpush1.bf16.msra.mxu0 0
        %1209 = vmatprep.subr.bf16.mxu0 0
        %1210 = vmatpush1.bf16.msra.mxu0 0
        %1211 = vmatprep.subr.bf16.mxu0 0
        %1212 = vmatpush1.bf16.msra.mxu0 0
        %1213 = vmatprep.subr.bf16.mxu0 0
        %1214 = vmatpush1.bf16.msra.mxu0 0
        %1215 = vmatprep.subr.bf16.mxu0 0
        %1216 = vmatpush1.bf16.msra.mxu0 0
        %1217 = vmatprep.subr.bf16.mxu0 0
        %1218 = vmatpush1.bf16.msra.mxu0 %v1201
        %1219 = vmatprep.subr.bf16.mxu0 0
        %1220 = vmatpush2.bf16.msra.mxu0 0
        %1221 = vmatprep.subr.bf16.mxu0 0
        %1222 = vmatpush2.bf16.msra.mxu0 0
        %1223 = vmatprep.subr.bf16.mxu0 0
        %1224 = vmatpush2.bf16.msra.mxu0 0
        %1225 = vmatprep.subr.bf16.mxu0 0
        %1226 = vmatpush2.bf16.msra.mxu0 0
        %1227 = vmatprep.subr.bf16.mxu0 0
        %1228 = vmatpush2.bf16.msra.mxu0 0
        %1229 = vmatprep.subr.bf16.mxu0 0
        %1230 = vmatpush2.bf16.msra.mxu0 0
        %1231 = vmatprep.subr.bf16.mxu0 0
        %1232 = vmatpush2.bf16.msra.mxu0 0
        %1233 = vmatprep.subr.bf16.mxu0 0
        %1234 = vmatpush2.bf16.msra.mxu0 0
        %1235 = vmatprep.mubr.bf16.mxu0 0
        %1236 = vmatmul.mubr.bf16.gmra.mxu0 %v1198
        %v1237 = vpop.f32.mrf.mxu0
        %v1238 = vadd.f32 0.0, %v1237
        %v1239 = vpop.f32.mrf.mxu0
        %v1240 = vpop.f32.mrf.mxu0
        %v1241 = vpop.f32.mrf.mxu0
        %1242 = vdwg.mxu0
        %1244 = vrot.lane.b32.xlu0 %v1014, 8
        %v1245 = vpop.permute.xlu0 %1244
        %1248 = vrot.lane.b32.xlu0 %v1126, 16
        %v1249 = vpop.permute.xlu0 %1248
        %1252 = vrot.lane.b32.xlu0 %v1238, 24
        %v1253 = vpop.permute.xlu0 %1252
        %v1255 = vsel %vm797, %v899, %v1245
        %vm1256 = vcmask 130048
        %v1257 = vsel %vm1256, %v1255, %v1249
        %vm1258 = vcmask 195584
        %v1259 = vsel %vm1258, %v1257, %v1253
        %v1260 = vld [vmem:[%s8] sm:$0x1]
        %v1262 = vlaneseq
        %v1263 = vshrl.u32 %v1262, 7
        %v1264 = vsub.s32 0, %v1263
        %v1265 = vrot.slane %v1260, %v1264
        %v1267 = vadd.f32 %v609, %v1265
        %v1268 = vpack.c.bf16 %v1259, %v1259
        %v1269 = vld [vmem:[#allocation14] sm:$0xf]
        %v1270 = vld [vmem:[#allocation14 + $0x4] sm:$0xf]
        %v1271 = vld [vmem:[#allocation14 + $0x8] sm:$0xf]
        %v1272 = vld [vmem:[#allocation14 + $0xc] sm:$0xf]
        %v1277 = vunpack.c.l.b16 %v1269
        %v1278 = vunpack.c.l.b16 %v1270
        %v1279 = vunpack.c.l.b16 %v1271
        %v1280 = vunpack.c.l.b16 %v1272
        %v1281 = vpack.c.b16 %v1278, %v1277
        %v1282 = vpack.c.b16 %v1280, %v1279
        %v1286 = vsel %vm629, %v1268, 0
        %1288 = vmatprep.subr.bf16.mxu0 0
        %1289 = vmatpush1.bf16.msra.mxu0 0
        %1290 = vmatprep.subr.bf16.mxu0 0
        %1291 = vmatpush1.bf16.msra.mxu0 0
        %1292 = vmatprep.subr.bf16.mxu0 0
        %1293 = vmatpush1.bf16.msra.mxu0 0
        %1294 = vmatprep.subr.bf16.mxu0 0
        %1295 = vmatpush1.bf16.msra.mxu0 0
        %1296 = vmatprep.subr.bf16.mxu0 0
        %1297 = vmatpush1.bf16.msra.mxu0 0
        %1298 = vmatprep.subr.bf16.mxu0 0
        %1299 = vmatpush1.bf16.msra.mxu0 0
        %1300 = vmatprep.subr.bf16.mxu0 0
        %1301 = vmatpush1.bf16.msra.mxu0 %v1282
        %1302 = vmatprep.subr.bf16.mxu0 0
        %1303 = vmatpush1.bf16.msra.mxu0 %v1281
        %1304 = vmatprep.subr.bf16.mxu0 0
        %1305 = vmatpush2.bf16.msra.mxu0 0
        %1306 = vmatprep.subr.bf16.mxu0 0
        %1307 = vmatpush2.bf16.msra.mxu0 0
        %1308 = vmatprep.subr.bf16.mxu0 0
        %1309 = vmatpush2.bf16.msra.mxu0 0
        %1310 = vmatprep.subr.bf16.mxu0 0
        %1311 = vmatpush2.bf16.msra.mxu0 0
        %1312 = vmatprep.subr.bf16.mxu0 0
        %1313 = vmatpush2.bf16.msra.mxu0 0
        %1314 = vmatprep.subr.bf16.mxu0 0
        %1315 = vmatpush2.bf16.msra.mxu0 0
        %1316 = vmatprep.subr.bf16.mxu0 0
        %1317 = vmatpush2.bf16.msra.mxu0 0
        %1318 = vmatprep.subr.bf16.mxu0 0
        %1319 = vmatpush2.bf16.msra.mxu0 0
        %1320 = vmatprep.mubr.bf16.mxu0 0
        %1321 = vmatmul.mubr.bf16.gmra.mxu0 %v1286
        %v1322 = vpop.f32.mrf.mxu0
        %v1323 = vadd.f32 0.0, %v1322
        %v1324 = vpop.f32.mrf.mxu0
        %v1325 = vpop.f32.mrf.mxu0
        %v1326 = vpop.f32.mrf.mxu0
        %1327 = vdwg.mxu0
        %v1328 = vadd.f32 %v1267, %v1323
        %v1329 = vsel %vm629, %v1328, 0.0
        %1330 = vadd.xlane.f32.xlu0 %v1329
        %v1331 = vpop.xlane.xlu0 %1330
        %v1332 = vrcp.pop 32.0
        %v1333 = vmul.f32 %v1331, %v1332
        %v1334 = vsub.f32 %v1328, %v1333
        %v1335 = vmul.f32 %v1334, %v1334
        %v1336 = vsel %vm629, %v1335, 0.0
        %1337 = vadd.xlane.f32.xlu0 %v1336
        %v1338 = vpop.xlane.xlu0 %1337
        %v1339 = vmul.f32 %v1338, %v1332
        %v1340 = vadd.f32 %v1339, 1e-05
        %v1341 = vrsqrt.pop %v1340
        %v1342 = vmul.f32 %v1334, %v1341
        %v1343 = vld [vmem:[%s9] sm:$0x1]
        %v1345 = vlaneseq
        %v1346 = vshrl.u32 %v1345, 7
        %v1347 = vsub.s32 0, %v1346
        %v1348 = vrot.slane %v1343, %v1347
        %v1350 = vmul.f32 %v1342, %v1348
        %v1351 = vld [vmem:[%s10] sm:$0x1]
        %v1353 = vlaneseq
        %v1354 = vshrl.u32 %v1353, 7
        %v1355 = vsub.s32 0, %v1354
        %v1356 = vrot.slane %v1351, %v1355
        %v1358 = vadd.f32 %v1350, %v1356
        %1359 = vst.msk [vmem:[%s600] sm:$0xff] %vm629, %v1358
        %s1360 = sand.u32 %s314, 1
        %s1361 = scalar_lea.sflag [#allocation4], %s1360
        %s1362 = sand.u32 %s314, 1
        %s1363 = smul.addr %s1362, 8
        %s1364 = scalar_lea.vmem [#allocation16], %s1363
        %s1365 = sand.u32 %s342, 1
        %s1366 = scalar_lea.sflag [#allocation18], %s1365
        %s1367 = sand.u32 %s342, 1
        %s1368 = smul.addr %s1367, 32
        %s1369 = scalar_lea.vmem [#allocation17], %s1368
        // Predicated region
        $region97: #{tpu_custom_call.1} parent=63 // pred_check
          %p1370 = pneg %p324
        $region98: #{tpu_custom_call.1} parent=63 // pred_check_branch
          %1372 = sbr.rel (%p1370) target = $region100
        $region99: #{tpu_custom_call.1} parent=63 // pred_region
          %s1374 = ssub.s32 128, 128
          %1375 = vsyncadd %s1361, %s1374
          %s1376 = sadd.s32 %s44, %s43
          %s1377 = smul.addr %s1376, 128
          %s1378 = scalar_lea.hbm %s11, %s1377
          %s1380 = sshll.u32 %s1364, 4
          %s1381 = int_to_ptr.vmem [resolvable:$true] %s1380
          %1383 = dma.vmem_to_hbm [thread:$0]  %s1381, 128, %s1378, %s1361
        $region100: #{tpu_custom_call.1} parent=63 // pred_fallthru
          _
        // Predicated region
        $region101: #{tpu_custom_call.1} parent=63 // pred_check
          %p1384 = pneg %p352
        $region102: #{tpu_custom_call.1} parent=63 // pred_check_branch
          %1386 = sbr.rel (%p1384) target = $region104
        $region103: #{tpu_custom_call.1} parent=63 // pred_region
          %s1388 = ssub.s32 512, 512
          %1389 = vsyncadd %s1366, %s1388
          %s1390 = sadd.s32 %s44, %s43
          %s1391 = smul.addr %s1390, 128
          %s1392 = scalar_lea.hbm %s12, %s1391
          %s1393 = sshll.u32 %s1369, 4
          %s1394 = int_to_ptr.vmem [resolvable:$true] %s1393
          %1399 = dma.vmem_to_hbm [thread:$0]  %s1394, 512, %s1392, %s1366, 128, 256, 8
        $region104: #{tpu_custom_call.1} parent=63 // pred_fallthru
          _
      $region64: #{tpu_custom_call.1} parent=5 // pred_fallthru
        _
      %p1400 = scmp.le.s32.totalorder 2, %s34
      // Predicated region
      $region105: #{tpu_custom_call.1} parent=5 // pred_check
        %p1401 = pneg %p1400
      $region106: #{tpu_custom_call.1} parent=5 // pred_check_branch
        %1403 = sbr.rel (%p1401) target = $region108
      $region107: #{tpu_custom_call.1} parent=5 // pred_region
        %s1404 = ssub.s32 %s34, 2
        // Predicated region
        $region109: #{tpu_custom_call.1} parent=107 // pred_check
          %p1405 = pneg %p330
        $region110: #{tpu_custom_call.1} parent=107 // pred_check_branch
          %1407 = sbr.rel (%p1405) target = $region112
        $region111: #{tpu_custom_call.1} parent=107 // pred_region
          %s1408 = sand.u32 %s315, 1
          %s1409 = scalar_lea.sflag [#allocation4], %s1408
          %s1410 = sand.u32 %s315, 1
          %s1411 = smul.addr %s1410, 8
          %s1412 = scalar_lea.vmem [#allocation16], %s1411
          %1413 = dma.done %s1409, 128
        $region112: #{tpu_custom_call.1} parent=107 // pred_fallthru
          _
        // Predicated region
        $region113: #{tpu_custom_call.1} parent=107 // pred_check
          %p1414 = pneg %p358
        $region114: #{tpu_custom_call.1} parent=107 // pred_check_branch
          %1416 = sbr.rel (%p1414) target = $region116
        $region115: #{tpu_custom_call.1} parent=107 // pred_region
          %s1417 = sand.u32 %s343, 1
          %s1418 = scalar_lea.sflag [#allocation18], %s1417
          %s1419 = sand.u32 %s343, 1
          %s1420 = smul.addr %s1419, 32
          %s1421 = scalar_lea.vmem [#allocation17], %s1420
          %1422 = dma.done %s1418, 512
        $region116: #{tpu_custom_call.1} parent=107 // pred_fallthru
          _
      $region108: #{tpu_custom_call.1} parent=5 // pred_fallthru
        _
    $region6: #{tpu_custom_call.1} parent=1 // loop_footer
      %s38 = sadd.s32 1, %s34
    $region7: #{tpu_custom_call.1} parent=1 // loop_footer_branch
      %33 = sbr.rel target = $region3
    $region8: #{tpu_custom_call.1} parent=1 // loop_exit
      _
    %1423 = vsyncpa [#allocation3], 1
    %s1424 = scalar_lea.sflag [#allocation3], 1
    %1425 = vsyncpa %s1424, 1
    %1426 = vsyncpa [#allocation6], 1
    %s1427 = scalar_lea.sflag [#allocation6], 1
    %1428 = vsyncpa %s1427, 1
    %1429 = vsyncpa [#allocation9], 1
    %1430 = vsyncpa [#allocation12], 1
    %1431 = vsyncpa [#allocation15], 1
    %1432 = vsyncpa [#allocation4], 1
    %s1433 = scalar_lea.sflag [#allocation4], 1
    %1434 = vsyncpa %s1433, 1
    %1435 = vsyncpa [#allocation18], 1
    %s1436 = scalar_lea.sflag [#allocation18], 1
    %1437 = vsyncpa %s1436, 1

</llo_original>
